<compile_context>
chip_gen: v5e
topology: v5e:2x2
jax: 0.10.0
libtpu: 0.0.40
codegen_flags: <defaults>
</compile_context>

<pallas_src>
import jax
import jax.numpy as jnp
from jax.experimental import pallas as pl
from jax.experimental.pallas import tpu as pltpu


# --------------------------------------------------------------------------- #
# Fused decoder kernel: GRU + Bahdanau attention + output head
# --------------------------------------------------------------------------- #
def decoder_kernel(
    x_ref,         # (T*B, I)   embedded tgt, time-major rows (t*B + b)
    h0_ref,        # (B, H)     initial hidden state
    wih_ref,       # (3, I, H)  GRU input weights, gate order (r, z, n)
    whh_ref,       # (3, H, H)  GRU hidden weights
    bih_ref,       # (3, 1, H)
    bhh_ref,       # (3, 1, H)
    outs_ref,      # (B, S, 2H) encoder outputs, batch-major
    outs_flat_ref, # (B*S, 2H)  same data pre-flattened in wrapper (row = b*S+s)
    mask_ref,      # (B, 1, S)  additive mask: v-bias where valid, -inf where pad
    w1_ref,        # (2H, H)    Attn.fc1
    w2_ref,        # (H, H)     Attn.fc2
    attn_b_ref,    # (1, H)     Attn.fc1.bias + Attn.fc2.bias (folded)
    v_ref,         # (1, H)     Attn.v weight (row)
    fc_w_ref,      # (2H, H)    Decoder.fc
    fh_w_ref,      # (H, H)     Decoder.fh
    fcfh_b_ref,    # (1, H)     fc.bias + fh.bias (folded)
    ws_w_ref,      # (H, V)     Decoder.ws
    ws_b_ref,      # (1, V)
    logits_ref,    # OUT (B*T, V)  row = b*T + t
    state_ref,     # OUT (B, H)
    ss_scr,        # scratch VMEM (B, T, H) — GRU outputs, batch-major
):
    B, T, H = ss_scr.shape
    S = outs_ref.shape[1]

    # ---- GRU: hoisted input projection (one matmul per gate over all T*B rows)
    x = x_ref[...]                                             # (T*B, I)
    gi = [jnp.dot(x, wih_ref[g], preferred_element_type=jnp.float32) + bih_ref[g]
          for g in range(3)]                                   # each (T*B, H)

    # ---- GRU recurrence: only h @ W_hh stays on the serial path
    whh = [whh_ref[g] for g in range(3)]
    bhh = [bhh_ref[g] for g in range(3)]
    h = h0_ref[...]                                            # (B, H)
    for t in range(T):                                         # static unroll (tiny T)
        lo = t * B
        gh_r = jnp.dot(h, whh[0], preferred_element_type=jnp.float32) + bhh[0]
        gh_z = jnp.dot(h, whh[1], preferred_element_type=jnp.float32) + bhh[1]
        gh_n = jnp.dot(h, whh[2], preferred_element_type=jnp.float32) + bhh[2]
        r = jax.nn.sigmoid(gi[0][lo:lo + B] + gh_r)
        z = jax.nn.sigmoid(gi[1][lo:lo + B] + gh_z)
        n = jnp.tanh(gi[2][lo:lo + B] + r * gh_n)
        h = (1.0 - z) * n + z * h
        ss_scr[:, pl.ds(t, 1), :] = h[:, None, :]              # batch-major store
    state_ref[...] = h                                         # new_state (B, H)

    ss = ss_scr[...]                                           # (B, T, H)
    ss_flat = ss.reshape(B * T, H)                             # rows = b*T + t

    # ---- additive attention, batched over (B, T, S)
    wh = jnp.dot(outs_flat_ref[...], w1_ref[...],
                 preferred_element_type=jnp.float32).reshape(B, S, H)
    ws = (jnp.dot(ss_flat, w2_ref[...], preferred_element_type=jnp.float32)
          + attn_b_ref[...]).reshape(B, T, H)
    hs = jnp.tanh(ws[:, :, None, :] + wh[:, None, :, :])       # (B, T, S, H)
    e = jnp.sum(hs * v_ref[...], axis=-1)                      # (B, T, S)
    e = e + mask_ref[...]                                      # + v bias / -inf pad

    m = jnp.max(e, axis=-1, keepdims=True)
    p = jnp.exp(e - m)
    a = p / jnp.sum(p, axis=-1, keepdims=True)                 # softmax over S

    ctx = jnp.einsum('bts,bse->bte', a, outs_ref[...],
                     preferred_element_type=jnp.float32)       # (B, T, 2H)

    # ---- output head: ws(tanh(fc(ctx) + fh(ss)))  (biases folded into fcfh_b)
    rhead = jnp.tanh(
        jnp.dot(ctx.reshape(B * T, 2 * H), fc_w_ref[...],
                preferred_element_type=jnp.float32)
        + jnp.dot(ss_flat, fh_w_ref[...], preferred_element_type=jnp.float32)
        + fcfh_b_ref[...])                                     # (B*T, H)
    logits_ref[...] = (jnp.dot(rhead, ws_w_ref[...],
                               preferred_element_type=jnp.float32)
                       + ws_b_ref[...])                        # (B*T, V)


# --------------------------------------------------------------------------- #
# Parameter init (deterministic, shapes from Decoder.__init__)
# --------------------------------------------------------------------------- #
def init_params(key, input_size, hidden_size, vocab_size):
    H, I, V = hidden_size, input_size, vocab_size
    ks = jax.random.split(key, 17)

    def u(k, shape, scale):
        return jax.random.uniform(k, shape, jnp.float32, -scale, scale)

    sH, s2H = 1.0 / jnp.sqrt(H), 1.0 / jnp.sqrt(2.0 * H)
    return dict(
        emb=u(ks[0], (V, I), 0.1),                 # nn.Embedding(V, input_size)
        w_ih=u(ks[1], (3, I, H), sH),              # GRU weight_ih, per-gate (r,z,n)
        w_hh=u(ks[2], (3, H, H), sH),              # GRU weight_hh, per-gate
        b_ih=u(ks[3], (3, 1, H), sH),
        b_hh=u(ks[4], (3, 1, H), sH),
        attn_w1=u(ks[5], (2 * H, H), s2H),         # Attn.fc1
        attn_b1=u(ks[6], (1, H), s2H),
        attn_w2=u(ks[7], (H, H), sH),              # Attn.fc2
        attn_b2=u(ks[8], (1, H), sH),
        attn_v=u(ks[9], (1, H), sH),               # Attn.v (weight row)
        attn_vb=u(ks[10], (1, 1), sH),             # Attn.v bias
        fc_w=u(ks[11], (2 * H, H), s2H),           # Decoder.fc
        fc_b=u(ks[12], (1, H), s2H),
        fh_w=u(ks[13], (H, H), sH),                # Decoder.fh
        fh_b=u(ks[14], (1, H), sH),
        ws_w=u(ks[15], (H, V), sH),                # Decoder.ws
        ws_b=u(ks[16], (1, V), sH),
    )


# --------------------------------------------------------------------------- #
# Decoder forward (teacher-forcing branch)
# --------------------------------------------------------------------------- #
def decoder_forward(params, tgt, state, outputs, src_len):
    """
    tgt:     (tgt_seq_len, batch) int32
    state:   (num_layers=1, batch, hidden)
    outputs: (src_seq_len, batch, hidden*2)
    src_len: (batch,) int32
    returns: result (tgt_seq_len, batch, vocab), state (1, batch, hidden)
    """
    T, B = tgt.shape
    H = state.shape[-1]
    S = outputs.shape[0]
    V, I = params['emb'].shape

    # glue: embedding gather, layout transposes, host-style mask construction
    embedded = jnp.take(params['emb'], tgt, axis=0)                    # (T, B, I)
    x_flat = embedded.reshape(T * B, I)
    outputs_bm = jnp.transpose(outputs, (1, 0, 2))                     # (B, S, 2H)
    outputs_flat = outputs_bm.reshape(B * S, 2 * H)                    # row = b*S + s

    # additive length mask; attention-v bias folded in (cancels in softmax,
    # kept so the pre-softmax energies match the reference exactly)
    col = jnp.arange(S, dtype=jnp.int32)[None, None, :]
    valid = col < src_len.astype(jnp.int32)[:, None, None]             # (B, 1, S)
    mask = jnp.where(valid, params['attn_vb'][0, 0], -jnp.inf).astype(jnp.float32)

    attn_b = params['attn_b1'] + params['attn_b2']                     # fold fc1+fc2 biases
    fcfh_b = params['fc_b'] + params['fh_b']                           # fold fc+fh biases

    logits_flat, hT = pl.pallas_call(
        decoder_kernel,
        out_shape=(jax.ShapeDtypeStruct((B * T, V), jnp.float32),
                   jax.ShapeDtypeStruct((B, H), jnp.float32)),
        scratch_shapes=[pltpu.VMEM((B, T, H), jnp.float32)],
    )(x_flat, state[0], params['w_ih'], params['w_hh'], params['b_ih'],
      params['b_hh'], outputs_bm, outputs_flat, mask,
      params['attn_w1'], params['attn_w2'], attn_b, params['attn_v'],
      params['fc_w'], params['fh_w'], fcfh_b, params['ws_w'], params['ws_b'])

    result = jnp.transpose(logits_flat.reshape(B, T, V), (1, 0, 2))    # (T, B, V)
    return result, hT[None]                                            # (1, B, H)


if __name__ == "__main__":
    hidden_size, input_size, vocab_size = 32, 16, 64
    batch, tgt_seq_len, src_seq_len = 2, 5, 7

    key = jax.random.PRNGKey(0)
    kp, k1, k2, k3 = jax.random.split(key, 4)
    params = init_params(kp, input_size, hidden_size, vocab_size)

    tgt = jax.random.randint(k1, (tgt_seq_len, batch), 0, vocab_size, dtype=jnp.int32)
    state = jax.random.normal(k2, (1, batch, hidden_size), jnp.float32)
    outputs = jax.random.normal(k3, (src_seq_len, batch, 2 * hidden_size), jnp.float32)
    src_len = jnp.array([src_seq_len, 4], dtype=jnp.int32)

    # teacher_forcing = 1.0 -> the teacher-forced branch is always taken
    fwd = jax.jit(decoder_forward)
    result, new_state = fwd(params, tgt, state, outputs, src_len)
    jax.block_until_ready((result, new_state))

    assert result.shape == (tgt_seq_len, batch, vocab_size)
    assert new_state.shape == (1, batch, hidden_size)
    assert bool(jnp.all(jnp.isfinite(result))) and bool(jnp.all(jnp.isfinite(new_state)))
    print("KERNEL_OK")
</pallas_src>

<mosaic_0001>
module attributes {stable_mosaic.version = 11 : i64} {
  func.func @decoder_kernel(%arg0: memref<10x16xf32, #tpu.memory_space<vmem>>, %arg1: memref<2x32xf32, #tpu.memory_space<vmem>>, %arg2: memref<3x16x32xf32, #tpu.memory_space<vmem>>, %arg3: memref<3x32x32xf32, #tpu.memory_space<vmem>>, %arg4: memref<3x1x32xf32, #tpu.memory_space<vmem>>, %arg5: memref<3x1x32xf32, #tpu.memory_space<vmem>>, %arg6: memref<2x7x64xf32, #tpu.memory_space<vmem>>, %arg7: memref<14x64xf32, #tpu.memory_space<vmem>>, %arg8: memref<2x1x7xf32, #tpu.memory_space<vmem>>, %arg9: memref<64x32xf32, #tpu.memory_space<vmem>>, %arg10: memref<32x32xf32, #tpu.memory_space<vmem>>, %arg11: memref<1x32xf32, #tpu.memory_space<vmem>>, %arg12: memref<1x32xf32, #tpu.memory_space<vmem>>, %arg13: memref<64x32xf32, #tpu.memory_space<vmem>>, %arg14: memref<32x32xf32, #tpu.memory_space<vmem>>, %arg15: memref<1x32xf32, #tpu.memory_space<vmem>>, %arg16: memref<32x64xf32, #tpu.memory_space<vmem>>, %arg17: memref<1x64xf32, #tpu.memory_space<vmem>>, %arg18: memref<10x64xf32, #tpu.memory_space<vmem>>, %arg19: memref<2x32xf32, #tpu.memory_space<vmem>>, %arg20: memref<2x5x32xf32, #tpu.memory_space<vmem>>) attributes {dimension_semantics = [], scalar_prefetch = 0 : i64, scratch_operands = 1 : i64, tpu.core_type = #tpu.core_type<tc>} {
    %c0 = arith.constant 0 : index
    %c0_0 = arith.constant 0 : index
    %0 = vector.load %arg0[%c0, %c0_0] : memref<10x16xf32, #tpu.memory_space<vmem>>, vector<10x16xf32>
    %c0_1 = arith.constant 0 : index
    %c0_2 = arith.constant 0 : index
    %c0_3 = arith.constant 0 : index
    %1 = vector.load %arg2[%c0_1, %c0_2, %c0_3] : memref<3x16x32xf32, #tpu.memory_space<vmem>>, vector<1x16x32xf32>
    %2 = vector.shape_cast %1 : vector<1x16x32xf32> to vector<16x32xf32>
    %cst = arith.constant dense<0.000000e+00> : vector<10x32xf32>
    %3 = tpu.matmul %0, %2, %cst {dimension_numbers = #tpu.dot_dimension_numbers<[1], [0], [0], [1], [0, 0, 1, 1], [], []>} : vector<10x16xf32>, vector<16x32xf32>, vector<10x32xf32> -> vector<10x32xf32>
    %c0_4 = arith.constant 0 : index
    %c0_5 = arith.constant 0 : index
    %c0_6 = arith.constant 0 : index
    %4 = vector.load %arg4[%c0_4, %c0_5, %c0_6] : memref<3x1x32xf32, #tpu.memory_space<vmem>>, vector<1x1x32xf32>
    %5 = vector.shape_cast %4 : vector<1x1x32xf32> to vector<1x32xf32>
    %6 = vector.broadcast %5 : vector<1x32xf32> to vector<10x32xf32>
    %7 = arith.addf %3, %6 : vector<10x32xf32>
    %c1 = arith.constant 1 : index
    %c0_7 = arith.constant 0 : index
    %c0_8 = arith.constant 0 : index
    %8 = vector.load %arg2[%c1, %c0_7, %c0_8] : memref<3x16x32xf32, #tpu.memory_space<vmem>>, vector<1x16x32xf32>
    %9 = vector.shape_cast %8 : vector<1x16x32xf32> to vector<16x32xf32>
    %cst_9 = arith.constant dense<0.000000e+00> : vector<10x32xf32>
    %10 = tpu.matmul %0, %9, %cst_9 {dimension_numbers = #tpu.dot_dimension_numbers<[1], [0], [0], [1], [0, 0, 1, 1], [], []>} : vector<10x16xf32>, vector<16x32xf32>, vector<10x32xf32> -> vector<10x32xf32>
    %c1_10 = arith.constant 1 : index
    %c0_11 = arith.constant 0 : index
    %c0_12 = arith.constant 0 : index
    %11 = vector.load %arg4[%c1_10, %c0_11, %c0_12] : memref<3x1x32xf32, #tpu.memory_space<vmem>>, vector<1x1x32xf32>
    %12 = vector.shape_cast %11 : vector<1x1x32xf32> to vector<1x32xf32>
    %13 = vector.broadcast %12 : vector<1x32xf32> to vector<10x32xf32>
    %14 = arith.addf %10, %13 : vector<10x32xf32>
    %c2 = arith.constant 2 : index
    %c0_13 = arith.constant 0 : index
    %c0_14 = arith.constant 0 : index
    %15 = vector.load %arg2[%c2, %c0_13, %c0_14] : memref<3x16x32xf32, #tpu.memory_space<vmem>>, vector<1x16x32xf32>
    %16 = vector.shape_cast %15 : vector<1x16x32xf32> to vector<16x32xf32>
    %cst_15 = arith.constant dense<0.000000e+00> : vector<10x32xf32>
    %17 = tpu.matmul %0, %16, %cst_15 {dimension_numbers = #tpu.dot_dimension_numbers<[1], [0], [0], [1], [0, 0, 1, 1], [], []>} : vector<10x16xf32>, vector<16x32xf32>, vector<10x32xf32> -> vector<10x32xf32>
    %c2_16 = arith.constant 2 : index
    %c0_17 = arith.constant 0 : index
    %c0_18 = arith.constant 0 : index
    %18 = vector.load %arg4[%c2_16, %c0_17, %c0_18] : memref<3x1x32xf32, #tpu.memory_space<vmem>>, vector<1x1x32xf32>
    %19 = vector.shape_cast %18 : vector<1x1x32xf32> to vector<1x32xf32>
    %20 = vector.broadcast %19 : vector<1x32xf32> to vector<10x32xf32>
    %21 = arith.addf %17, %20 : vector<10x32xf32>
    %c0_19 = arith.constant 0 : index
    %c0_20 = arith.constant 0 : index
    %c0_21 = arith.constant 0 : index
    %22 = vector.load %arg3[%c0_19, %c0_20, %c0_21] : memref<3x32x32xf32, #tpu.memory_space<vmem>>, vector<1x32x32xf32>
    %23 = vector.shape_cast %22 : vector<1x32x32xf32> to vector<32x32xf32>
    %c1_22 = arith.constant 1 : index
    %c0_23 = arith.constant 0 : index
    %c0_24 = arith.constant 0 : index
    %24 = vector.load %arg3[%c1_22, %c0_23, %c0_24] : memref<3x32x32xf32, #tpu.memory_space<vmem>>, vector<1x32x32xf32>
    %25 = vector.shape_cast %24 : vector<1x32x32xf32> to vector<32x32xf32>
    %c2_25 = arith.constant 2 : index
    %c0_26 = arith.constant 0 : index
    %c0_27 = arith.constant 0 : index
    %26 = vector.load %arg3[%c2_25, %c0_26, %c0_27] : memref<3x32x32xf32, #tpu.memory_space<vmem>>, vector<1x32x32xf32>
    %27 = vector.shape_cast %26 : vector<1x32x32xf32> to vector<32x32xf32>
    %c0_28 = arith.constant 0 : index
    %c0_29 = arith.constant 0 : index
    %c0_30 = arith.constant 0 : index
    %28 = vector.load %arg5[%c0_28, %c0_29, %c0_30] : memref<3x1x32xf32, #tpu.memory_space<vmem>>, vector<1x1x32xf32>
    %29 = vector.shape_cast %28 : vector<1x1x32xf32> to vector<1x32xf32>
    %c1_31 = arith.constant 1 : index
    %c0_32 = arith.constant 0 : index
    %c0_33 = arith.constant 0 : index
    %30 = vector.load %arg5[%c1_31, %c0_32, %c0_33] : memref<3x1x32xf32, #tpu.memory_space<vmem>>, vector<1x1x32xf32>
    %31 = vector.shape_cast %30 : vector<1x1x32xf32> to vector<1x32xf32>
    %c2_34 = arith.constant 2 : index
    %c0_35 = arith.constant 0 : index
    %c0_36 = arith.constant 0 : index
    %32 = vector.load %arg5[%c2_34, %c0_35, %c0_36] : memref<3x1x32xf32, #tpu.memory_space<vmem>>, vector<1x1x32xf32>
    %33 = vector.shape_cast %32 : vector<1x1x32xf32> to vector<1x32xf32>
    %c0_37 = arith.constant 0 : index
    %c0_38 = arith.constant 0 : index
    %34 = vector.load %arg1[%c0_37, %c0_38] : memref<2x32xf32, #tpu.memory_space<vmem>>, vector<2x32xf32>
    %cst_39 = arith.constant dense<0.000000e+00> : vector<2x32xf32>
    %35 = tpu.matmul %34, %23, %cst_39 {dimension_numbers = #tpu.dot_dimension_numbers<[1], [0], [0], [1], [0, 0, 1, 1], [], []>} : vector<2x32xf32>, vector<32x32xf32>, vector<2x32xf32> -> vector<2x32xf32>
    %36 = vector.broadcast %29 : vector<1x32xf32> to vector<2x32xf32>
    %37 = arith.addf %35, %36 : vector<2x32xf32>
    %cst_40 = arith.constant dense<0.000000e+00> : vector<2x32xf32>
    %38 = tpu.matmul %34, %25, %cst_40 {dimension_numbers = #tpu.dot_dimension_numbers<[1], [0], [0], [1], [0, 0, 1, 1], [], []>} : vector<2x32xf32>, vector<32x32xf32>, vector<2x32xf32> -> vector<2x32xf32>
    %39 = vector.broadcast %31 : vector<1x32xf32> to vector<2x32xf32>
    %40 = arith.addf %38, %39 : vector<2x32xf32>
    %cst_41 = arith.constant dense<0.000000e+00> : vector<2x32xf32>
    %41 = tpu.matmul %34, %27, %cst_41 {dimension_numbers = #tpu.dot_dimension_numbers<[1], [0], [0], [1], [0, 0, 1, 1], [], []>} : vector<2x32xf32>, vector<32x32xf32>, vector<2x32xf32> -> vector<2x32xf32>
    %42 = vector.broadcast %33 : vector<1x32xf32> to vector<2x32xf32>
    %43 = arith.addf %41, %42 : vector<2x32xf32>
    %44 = vector.extract_strided_slice %7 {offsets = [0, 0], sizes = [2, 32], strides = [1, 1]} : vector<10x32xf32> to vector<2x32xf32>
    %45 = arith.addf %44, %37 : vector<2x32xf32>
    %46 = arith.negf %45 : vector<2x32xf32>
    %47 = math.exp %46 : vector<2x32xf32>
    %cst_42 = arith.constant 1.000000e+00 : f32
    %48 = vector.broadcast %cst_42 : f32 to vector<2x32xf32>
    %49 = arith.addf %48, %47 : vector<2x32xf32>
    %50 = arith.divf %48, %49 : vector<2x32xf32>
    %51 = vector.extract_strided_slice %14 {offsets = [0, 0], sizes = [2, 32], strides = [1, 1]} : vector<10x32xf32> to vector<2x32xf32>
    %52 = arith.addf %51, %40 : vector<2x32xf32>
    %53 = arith.negf %52 : vector<2x32xf32>
    %54 = math.exp %53 : vector<2x32xf32>
    %cst_43 = arith.constant 1.000000e+00 : f32
    %55 = vector.broadcast %cst_43 : f32 to vector<2x32xf32>
    %56 = arith.addf %55, %54 : vector<2x32xf32>
    %57 = arith.divf %55, %56 : vector<2x32xf32>
    %58 = vector.extract_strided_slice %21 {offsets = [0, 0], sizes = [2, 32], strides = [1, 1]} : vector<10x32xf32> to vector<2x32xf32>
    %59 = arith.mulf %50, %43 : vector<2x32xf32>
    %60 = arith.addf %58, %59 : vector<2x32xf32>
    %61 = math.tanh %60 : vector<2x32xf32>
    %cst_44 = arith.constant 1.000000e+00 : f32
    %62 = vector.broadcast %cst_44 : f32 to vector<2x32xf32>
    %63 = arith.subf %62, %57 : vector<2x32xf32>
    %64 = arith.mulf %63, %61 : vector<2x32xf32>
    %65 = arith.mulf %57, %34 : vector<2x32xf32>
    %66 = arith.addf %64, %65 : vector<2x32xf32>
    %67 = vector.shape_cast %66 : vector<2x32xf32> to vector<2x1x32xf32>
    %c0_45 = arith.constant 0 : index
    %c0_46 = arith.constant 0 : index
    %c0_47 = arith.constant 0 : index
    %68 = vector.load %arg20[%c0_45, %c0_46, %c0_47] : memref<2x5x32xf32, #tpu.memory_space<vmem>>, vector<2x1x32xf32>
    tpu.vector_store %arg20[%c0_45, %c0_46, %c0_47], %67 {strides = array<i32>} : memref<2x5x32xf32, #tpu.memory_space<vmem>>, vector<2x1x32xf32>,
    %cst_48 = arith.constant dense<0.000000e+00> : vector<2x32xf32>
    %69 = tpu.matmul %66, %23, %cst_48 {dimension_numbers = #tpu.dot_dimension_numbers<[1], [0], [0], [1], [0, 0, 1, 1], [], []>} : vector<2x32xf32>, vector<32x32xf32>, vector<2x32xf32> -> vector<2x32xf32>
    %70 = vector.broadcast %29 : vector<1x32xf32> to vector<2x32xf32>
    %71 = arith.addf %69, %70 : vector<2x32xf32>
    %cst_49 = arith.constant dense<0.000000e+00> : vector<2x32xf32>
    %72 = tpu.matmul %66, %25, %cst_49 {dimension_numbers = #tpu.dot_dimension_numbers<[1], [0], [0], [1], [0, 0, 1, 1], [], []>} : vector<2x32xf32>, vector<32x32xf32>, vector<2x32xf32> -> vector<2x32xf32>
    %73 = vector.broadcast %31 : vector<1x32xf32> to vector<2x32xf32>
    %74 = arith.addf %72, %73 : vector<2x32xf32>
    %cst_50 = arith.constant dense<0.000000e+00> : vector<2x32xf32>
    %75 = tpu.matmul %66, %27, %cst_50 {dimension_numbers = #tpu.dot_dimension_numbers<[1], [0], [0], [1], [0, 0, 1, 1], [], []>} : vector<2x32xf32>, vector<32x32xf32>, vector<2x32xf32> -> vector<2x32xf32>
    %76 = vector.broadcast %33 : vector<1x32xf32> to vector<2x32xf32>
    %77 = arith.addf %75, %76 : vector<2x32xf32>
    %78 = vector.extract_strided_slice %7 {offsets = [2, 0], sizes = [2, 32], strides = [1, 1]} : vector<10x32xf32> to vector<2x32xf32>
    %79 = arith.addf %78, %71 : vector<2x32xf32>
    %80 = arith.negf %79 : vector<2x32xf32>
    %81 = math.exp %80 : vector<2x32xf32>
    %cst_51 = arith.constant 1.000000e+00 : f32
    %82 = vector.broadcast %cst_51 : f32 to vector<2x32xf32>
    %83 = arith.addf %82, %81 : vector<2x32xf32>
    %84 = arith.divf %82, %83 : vector<2x32xf32>
    %85 = vector.extract_strided_slice %14 {offsets = [2, 0], sizes = [2, 32], strides = [1, 1]} : vector<10x32xf32> to vector<2x32xf32>
    %86 = arith.addf %85, %74 : vector<2x32xf32>
    %87 = arith.negf %86 : vector<2x32xf32>
    %88 = math.exp %87 : vector<2x32xf32>
    %cst_52 = arith.constant 1.000000e+00 : f32
    %89 = vector.broadcast %cst_52 : f32 to vector<2x32xf32>
    %90 = arith.addf %89, %88 : vector<2x32xf32>
    %91 = arith.divf %89, %90 : vector<2x32xf32>
    %92 = vector.extract_strided_slice %21 {offsets = [2, 0], sizes = [2, 32], strides = [1, 1]} : vector<10x32xf32> to vector<2x32xf32>
    %93 = arith.mulf %84, %77 : vector<2x32xf32>
    %94 = arith.addf %92, %93 : vector<2x32xf32>
    %95 = math.tanh %94 : vector<2x32xf32>
    %cst_53 = arith.constant 1.000000e+00 : f32
    %96 = vector.broadcast %cst_53 : f32 to vector<2x32xf32>
    %97 = arith.subf %96, %91 : vector<2x32xf32>
    %98 = arith.mulf %97, %95 : vector<2x32xf32>
    %99 = arith.mulf %91, %66 : vector<2x32xf32>
    %100 = arith.addf %98, %99 : vector<2x32xf32>
    %101 = vector.shape_cast %100 : vector<2x32xf32> to vector<2x1x32xf32>
    %c0_54 = arith.constant 0 : index
    %c1_55 = arith.constant 1 : index
    %c0_56 = arith.constant 0 : index
    %102 = vector.load %arg20[%c0_54, %c1_55, %c0_56] : memref<2x5x32xf32, #tpu.memory_space<vmem>>, vector<2x1x32xf32>
    tpu.vector_store %arg20[%c0_54, %c1_55, %c0_56], %101 {strides = array<i32>} : memref<2x5x32xf32, #tpu.memory_space<vmem>>, vector<2x1x32xf32>,
    %cst_57 = arith.constant dense<0.000000e+00> : vector<2x32xf32>
    %103 = tpu.matmul %100, %23, %cst_57 {dimension_numbers = #tpu.dot_dimension_numbers<[1], [0], [0], [1], [0, 0, 1, 1], [], []>} : vector<2x32xf32>, vector<32x32xf32>, vector<2x32xf32> -> vector<2x32xf32>
    %104 = vector.broadcast %29 : vector<1x32xf32> to vector<2x32xf32>
    %105 = arith.addf %103, %104 : vector<2x32xf32>
    %cst_58 = arith.constant dense<0.000000e+00> : vector<2x32xf32>
    %106 = tpu.matmul %100, %25, %cst_58 {dimension_numbers = #tpu.dot_dimension_numbers<[1], [0], [0], [1], [0, 0, 1, 1], [], []>} : vector<2x32xf32>, vector<32x32xf32>, vector<2x32xf32> -> vector<2x32xf32>
    %107 = vector.broadcast %31 : vector<1x32xf32> to vector<2x32xf32>
    %108 = arith.addf %106, %107 : vector<2x32xf32>
    %cst_59 = arith.constant dense<0.000000e+00> : vector<2x32xf32>
    %109 = tpu.matmul %100, %27, %cst_59 {dimension_numbers = #tpu.dot_dimension_numbers<[1], [0], [0], [1], [0, 0, 1, 1], [], []>} : vector<2x32xf32>, vector<32x32xf32>, vector<2x32xf32> -> vector<2x32xf32>
    %110 = vector.broadcast %33 : vector<1x32xf32> to vector<2x32xf32>
    %111 = arith.addf %109, %110 : vector<2x32xf32>
    %112 = vector.extract_strided_slice %7 {offsets = [4, 0], sizes = [2, 32], strides = [1, 1]} : vector<10x32xf32> to vector<2x32xf32>
    %113 = arith.addf %112, %105 : vector<2x32xf32>
    %114 = arith.negf %113 : vector<2x32xf32>
    %115 = math.exp %114 : vector<2x32xf32>
    %cst_60 = arith.constant 1.000000e+00 : f32
    %116 = vector.broadcast %cst_60 : f32 to vector<2x32xf32>
    %117 = arith.addf %116, %115 : vector<2x32xf32>
    %118 = arith.divf %116, %117 : vector<2x32xf32>
    %119 = vector.extract_strided_slice %14 {offsets = [4, 0], sizes = [2, 32], strides = [1, 1]} : vector<10x32xf32> to vector<2x32xf32>
    %120 = arith.addf %119, %108 : vector<2x32xf32>
    %121 = arith.negf %120 : vector<2x32xf32>
    %122 = math.exp %121 : vector<2x32xf32>
    %cst_61 = arith.constant 1.000000e+00 : f32
    %123 = vector.broadcast %cst_61 : f32 to vector<2x32xf32>
    %124 = arith.addf %123, %122 : vector<2x32xf32>
    %125 = arith.divf %123, %124 : vector<2x32xf32>
    %126 = vector.extract_strided_slice %21 {offsets = [4, 0], sizes = [2, 32], strides = [1, 1]} : vector<10x32xf32> to vector<2x32xf32>
    %127 = arith.mulf %118, %111 : vector<2x32xf32>
    %128 = arith.addf %126, %127 : vector<2x32xf32>
    %129 = math.tanh %128 : vector<2x32xf32>
    %cst_62 = arith.constant 1.000000e+00 : f32
    %130 = vector.broadcast %cst_62 : f32 to vector<2x32xf32>
    %131 = arith.subf %130, %125 : vector<2x32xf32>
    %132 = arith.mulf %131, %129 : vector<2x32xf32>
    %133 = arith.mulf %125, %100 : vector<2x32xf32>
    %134 = arith.addf %132, %133 : vector<2x32xf32>
    %135 = vector.shape_cast %134 : vector<2x32xf32> to vector<2x1x32xf32>
    %c0_63 = arith.constant 0 : index
    %c2_64 = arith.constant 2 : index
    %c0_65 = arith.constant 0 : index
    %136 = vector.load %arg20[%c0_63, %c2_64, %c0_65] : memref<2x5x32xf32, #tpu.memory_space<vmem>>, vector<2x1x32xf32>
    tpu.vector_store %arg20[%c0_63, %c2_64, %c0_65], %135 {strides = array<i32>} : memref<2x5x32xf32, #tpu.memory_space<vmem>>, vector<2x1x32xf32>,
    %cst_66 = arith.constant dense<0.000000e+00> : vector<2x32xf32>
    %137 = tpu.matmul %134, %23, %cst_66 {dimension_numbers = #tpu.dot_dimension_numbers<[1], [0], [0], [1], [0, 0, 1, 1], [], []>} : vector<2x32xf32>, vector<32x32xf32>, vector<2x32xf32> -> vector<2x32xf32>
    %138 = vector.broadcast %29 : vector<1x32xf32> to vector<2x32xf32>
    %139 = arith.addf %137, %138 : vector<2x32xf32>
    %cst_67 = arith.constant dense<0.000000e+00> : vector<2x32xf32>
    %140 = tpu.matmul %134, %25, %cst_67 {dimension_numbers = #tpu.dot_dimension_numbers<[1], [0], [0], [1], [0, 0, 1, 1], [], []>} : vector<2x32xf32>, vector<32x32xf32>, vector<2x32xf32> -> vector<2x32xf32>
    %141 = vector.broadcast %31 : vector<1x32xf32> to vector<2x32xf32>
    %142 = arith.addf %140, %141 : vector<2x32xf32>
    %cst_68 = arith.constant dense<0.000000e+00> : vector<2x32xf32>
    %143 = tpu.matmul %134, %27, %cst_68 {dimension_numbers = #tpu.dot_dimension_numbers<[1], [0], [0], [1], [0, 0, 1, 1], [], []>} : vector<2x32xf32>, vector<32x32xf32>, vector<2x32xf32> -> vector<2x32xf32>
    %144 = vector.broadcast %33 : vector<1x32xf32> to vector<2x32xf32>
    %145 = arith.addf %143, %144 : vector<2x32xf32>
    %146 = vector.extract_strided_slice %7 {offsets = [6, 0], sizes = [2, 32], strides = [1, 1]} : vector<10x32xf32> to vector<2x32xf32>
    %147 = arith.addf %146, %139 : vector<2x32xf32>
    %148 = arith.negf %147 : vector<2x32xf32>
    %149 = math.exp %148 : vector<2x32xf32>
    %cst_69 = arith.constant 1.000000e+00 : f32
    %150 = vector.broadcast %cst_69 : f32 to vector<2x32xf32>
    %151 = arith.addf %150, %149 : vector<2x32xf32>
    %152 = arith.divf %150, %151 : vector<2x32xf32>
    %153 = vector.extract_strided_slice %14 {offsets = [6, 0], sizes = [2, 32], strides = [1, 1]} : vector<10x32xf32> to vector<2x32xf32>
    %154 = arith.addf %153, %142 : vector<2x32xf32>
    %155 = arith.negf %154 : vector<2x32xf32>
    %156 = math.exp %155 : vector<2x32xf32>
    %cst_70 = arith.constant 1.000000e+00 : f32
    %157 = vector.broadcast %cst_70 : f32 to vector<2x32xf32>
    %158 = arith.addf %157, %156 : vector<2x32xf32>
    %159 = arith.divf %157, %158 : vector<2x32xf32>
    %160 = vector.extract_strided_slice %21 {offsets = [6, 0], sizes = [2, 32], strides = [1, 1]} : vector<10x32xf32> to vector<2x32xf32>
    %161 = arith.mulf %152, %145 : vector<2x32xf32>
    %162 = arith.addf %160, %161 : vector<2x32xf32>
    %163 = math.tanh %162 : vector<2x32xf32>
    %cst_71 = arith.constant 1.000000e+00 : f32
    %164 = vector.broadcast %cst_71 : f32 to vector<2x32xf32>
    %165 = arith.subf %164, %159 : vector<2x32xf32>
    %166 = arith.mulf %165, %163 : vector<2x32xf32>
    %167 = arith.mulf %159, %134 : vector<2x32xf32>
    %168 = arith.addf %166, %167 : vector<2x32xf32>
    %169 = vector.shape_cast %168 : vector<2x32xf32> to vector<2x1x32xf32>
    %c0_72 = arith.constant 0 : index
    %c3 = arith.constant 3 : index
    %c0_73 = arith.constant 0 : index
    %170 = vector.load %arg20[%c0_72, %c3, %c0_73] : memref<2x5x32xf32, #tpu.memory_space<vmem>>, vector<2x1x32xf32>
    tpu.vector_store %arg20[%c0_72, %c3, %c0_73], %169 {strides = array<i32>} : memref<2x5x32xf32, #tpu.memory_space<vmem>>, vector<2x1x32xf32>,
    %cst_74 = arith.constant dense<0.000000e+00> : vector<2x32xf32>
    %171 = tpu.matmul %168, %23, %cst_74 {dimension_numbers = #tpu.dot_dimension_numbers<[1], [0], [0], [1], [0, 0, 1, 1], [], []>} : vector<2x32xf32>, vector<32x32xf32>, vector<2x32xf32> -> vector<2x32xf32>
    %172 = vector.broadcast %29 : vector<1x32xf32> to vector<2x32xf32>
    %173 = arith.addf %171, %172 : vector<2x32xf32>
    %cst_75 = arith.constant dense<0.000000e+00> : vector<2x32xf32>
    %174 = tpu.matmul %168, %25, %cst_75 {dimension_numbers = #tpu.dot_dimension_numbers<[1], [0], [0], [1], [0, 0, 1, 1], [], []>} : vector<2x32xf32>, vector<32x32xf32>, vector<2x32xf32> -> vector<2x32xf32>
    %175 = vector.broadcast %31 : vector<1x32xf32> to vector<2x32xf32>
    %176 = arith.addf %174, %175 : vector<2x32xf32>
    %cst_76 = arith.constant dense<0.000000e+00> : vector<2x32xf32>
    %177 = tpu.matmul %168, %27, %cst_76 {dimension_numbers = #tpu.dot_dimension_numbers<[1], [0], [0], [1], [0, 0, 1, 1], [], []>} : vector<2x32xf32>, vector<32x32xf32>, vector<2x32xf32> -> vector<2x32xf32>
    %178 = vector.broadcast %33 : vector<1x32xf32> to vector<2x32xf32>
    %179 = arith.addf %177, %178 : vector<2x32xf32>
    %180 = vector.extract_strided_slice %7 {offsets = [8, 0], sizes = [2, 32], strides = [1, 1]} : vector<10x32xf32> to vector<2x32xf32>
    %181 = arith.addf %180, %173 : vector<2x32xf32>
    %182 = arith.negf %181 : vector<2x32xf32>
    %183 = math.exp %182 : vector<2x32xf32>
    %cst_77 = arith.constant 1.000000e+00 : f32
    %184 = vector.broadcast %cst_77 : f32 to vector<2x32xf32>
    %185 = arith.addf %184, %183 : vector<2x32xf32>
    %186 = arith.divf %184, %185 : vector<2x32xf32>
    %187 = vector.extract_strided_slice %14 {offsets = [8, 0], sizes = [2, 32], strides = [1, 1]} : vector<10x32xf32> to vector<2x32xf32>
    %188 = arith.addf %187, %176 : vector<2x32xf32>
    %189 = arith.negf %188 : vector<2x32xf32>
    %190 = math.exp %189 : vector<2x32xf32>
    %cst_78 = arith.constant 1.000000e+00 : f32
    %191 = vector.broadcast %cst_78 : f32 to vector<2x32xf32>
    %192 = arith.addf %191, %190 : vector<2x32xf32>
    %193 = arith.divf %191, %192 : vector<2x32xf32>
    %194 = vector.extract_strided_slice %21 {offsets = [8, 0], sizes = [2, 32], strides = [1, 1]} : vector<10x32xf32> to vector<2x32xf32>
    %195 = arith.mulf %186, %179 : vector<2x32xf32>
    %196 = arith.addf %194, %195 : vector<2x32xf32>
    %197 = math.tanh %196 : vector<2x32xf32>
    %cst_79 = arith.constant 1.000000e+00 : f32
    %198 = vector.broadcast %cst_79 : f32 to vector<2x32xf32>
    %199 = arith.subf %198, %193 : vector<2x32xf32>
    %200 = arith.mulf %199, %197 : vector<2x32xf32>
    %201 = arith.mulf %193, %168 : vector<2x32xf32>
    %202 = arith.addf %200, %201 : vector<2x32xf32>
    %203 = vector.shape_cast %202 : vector<2x32xf32> to vector<2x1x32xf32>
    %c0_80 = arith.constant 0 : index
    %c4 = arith.constant 4 : index
    %c0_81 = arith.constant 0 : index
    %204 = vector.load %arg20[%c0_80, %c4, %c0_81] : memref<2x5x32xf32, #tpu.memory_space<vmem>>, vector<2x1x32xf32>
    tpu.vector_store %arg20[%c0_80, %c4, %c0_81], %203 {strides = array<i32>} : memref<2x5x32xf32, #tpu.memory_space<vmem>>, vector<2x1x32xf32>,
    %c0_82 = arith.constant 0 : index
    %c0_83 = arith.constant 0 : index
    %205 = vector.load %arg19[%c0_82, %c0_83] : memref<2x32xf32, #tpu.memory_space<vmem>>, vector<2x32xf32>
    tpu.vector_store %arg19[%c0_82, %c0_83], %202 {strides = array<i32>} : memref<2x32xf32, #tpu.memory_space<vmem>>, vector<2x32xf32>,
    %c0_84 = arith.constant 0 : index
    %c0_85 = arith.constant 0 : index
    %c0_86 = arith.constant 0 : index
    %206 = vector.load %arg20[%c0_84, %c0_85, %c0_86] : memref<2x5x32xf32, #tpu.memory_space<vmem>>, vector<2x5x32xf32>
    %207 = vector.shape_cast %206 : vector<2x5x32xf32> to vector<10x32xf32>
    %c0_87 = arith.constant 0 : index
    %c0_88 = arith.constant 0 : index
    %208 = vector.load %arg7[%c0_87, %c0_88] : memref<14x64xf32, #tpu.memory_space<vmem>>, vector<14x64xf32>
    %c0_89 = arith.constant 0 : index
    %c0_90 = arith.constant 0 : index
    %209 = vector.load %arg9[%c0_89, %c0_90] : memref<64x32xf32, #tpu.memory_space<vmem>>, vector<64x32xf32>
    %cst_91 = arith.constant dense<0.000000e+00> : vector<14x32xf32>
    %210 = tpu.matmul %208, %209, %cst_91 {dimension_numbers = #tpu.dot_dimension_numbers<[1], [0], [0], [1], [0, 0, 1, 1], [], []>} : vector<14x64xf32>, vector<64x32xf32>, vector<14x32xf32> -> vector<14x32xf32>
    %211 = vector.shape_cast %210 : vector<14x32xf32> to vector<2x7x32xf32>
    %c0_92 = arith.constant 0 : index
    %c0_93 = arith.constant 0 : index
    %212 = vector.load %arg10[%c0_92, %c0_93] : memref<32x32xf32, #tpu.memory_space<vmem>>, vector<32x32xf32>
    %cst_94 = arith.constant dense<0.000000e+00> : vector<10x32xf32>
    %213 = tpu.matmul %207, %212, %cst_94 {dimension_numbers = #tpu.dot_dimension_numbers<[1], [0], [0], [1], [0, 0, 1, 1], [], []>} : vector<10x32xf32>, vector<32x32xf32>, vector<10x32xf32> -> vector<10x32xf32>
    %c0_95 = arith.constant 0 : index
    %c0_96 = arith.constant 0 : index
    %214 = vector.load %arg11[%c0_95, %c0_96] : memref<1x32xf32, #tpu.memory_space<vmem>>, vector<1x32xf32>
    %215 = vector.broadcast %214 : vector<1x32xf32> to vector<10x32xf32>
    %216 = arith.addf %213, %215 : vector<10x32xf32>
    %217 = vector.shape_cast %216 : vector<10x32xf32> to vector<2x5x32xf32>
    %218 = vector.shape_cast %217 : vector<2x5x32xf32> to vector<2x5x1x32xf32>
    %219 = vector.shape_cast %211 : vector<2x7x32xf32> to vector<2x1x7x32xf32>
    %220 = vector.broadcast %218 : vector<2x5x1x32xf32> to vector<2x5x7x32xf32>
    %221 = vector.broadcast %219 : vector<2x1x7x32xf32> to vector<2x5x7x32xf32>
    %222 = arith.addf %220, %221 : vector<2x5x7x32xf32>
    %223 = math.tanh %222 : vector<2x5x7x32xf32>
    %c0_97 = arith.constant 0 : index
    %c0_98 = arith.constant 0 : index
    %224 = vector.load %arg12[%c0_97, %c0_98] : memref<1x32xf32, #tpu.memory_space<vmem>>, vector<1x32xf32>
    %225 = vector.shape_cast %224 : vector<1x32xf32> to vector<1x1x1x32xf32>
    %226 = vector.broadcast %225 : vector<1x1x1x32xf32> to vector<2x5x7x32xf32>
    %227 = arith.mulf %223, %226 : vector<2x5x7x32xf32>
    %cst_99 = arith.constant dense<0.000000e+00> : vector<2x5x7xf32>
    %228 = vector.multi_reduction <add>, %227, %cst_99 [3] : vector<2x5x7x32xf32> to vector<2x5x7xf32>
    %c0_100 = arith.constant 0 : index
    %c0_101 = arith.constant 0 : index
    %c0_102 = arith.constant 0 : index
    %229 = vector.load %arg8[%c0_100, %c0_101, %c0_102] : memref<2x1x7xf32, #tpu.memory_space<vmem>>, vector<2x1x7xf32>
    %230 = vector.broadcast %229 : vector<2x1x7xf32> to vector<2x5x7xf32>
    %231 = arith.addf %228, %230 : vector<2x5x7xf32>
    %cst_103 = arith.constant dense<0xFF800000> : vector<2x5xf32>
    %232 = vector.multi_reduction <maximumf>, %231, %cst_103 [2] : vector<2x5x7xf32> to vector<2x5xf32>
    %233 = vector.shape_cast %232 : vector<2x5xf32> to vector<2x5x1xf32>
    %234 = vector.broadcast %233 : vector<2x5x1xf32> to vector<2x5x7xf32>
    %235 = arith.subf %231, %234 : vector<2x5x7xf32>
    %236 = math.exp %235 : vector<2x5x7xf32>
    %cst_104 = arith.constant dense<0.000000e+00> : vector<2x5xf32>
    %237 = vector.multi_reduction <add>, %236, %cst_104 [2] : vector<2x5x7xf32> to vector<2x5xf32>
    %238 = vector.shape_cast %237 : vector<2x5xf32> to vector<2x5x1xf32>
    %239 = vector.broadcast %238 : vector<2x5x1xf32> to vector<2x5x7xf32>
    %240 = arith.divf %236, %239 : vector<2x5x7xf32>
    %c0_105 = arith.constant 0 : index
    %c0_106 = arith.constant 0 : index
    %c0_107 = arith.constant 0 : index
    %241 = vector.load %arg6[%c0_105, %c0_106, %c0_107] : memref<2x7x64xf32, #tpu.memory_space<vmem>>, vector<2x7x64xf32>
    "tpu.trace_start"() <{level = 10 : i32, message = "bts,bse->bte"}> : () -> ()
    %cst_108 = arith.constant dense<0.000000e+00> : vector<2x5x64xf32>
    %242 = tpu.matmul %240, %241, %cst_108 {dimension_numbers = #tpu.dot_dimension_numbers<[2], [1], [1], [2], [0, 0, 0, 1, 1, 2], [0], [0]>} : vector<2x5x7xf32>, vector<2x7x64xf32>, vector<2x5x64xf32> -> vector<2x5x64xf32>
    "tpu.trace_stop"() : () -> ()
    %243 = vector.shape_cast %242 : vector<2x5x64xf32> to vector<10x64xf32>
    %c0_109 = arith.constant 0 : index
    %c0_110 = arith.constant 0 : index
    %244 = vector.load %arg13[%c0_109, %c0_110] : memref<64x32xf32, #tpu.memory_space<vmem>>, vector<64x32xf32>
    %cst_111 = arith.constant dense<0.000000e+00> : vector<10x32xf32>
    %245 = tpu.matmul %243, %244, %cst_111 {dimension_numbers = #tpu.dot_dimension_numbers<[1], [0], [0], [1], [0, 0, 1, 1], [], []>} : vector<10x64xf32>, vector<64x32xf32>, vector<10x32xf32> -> vector<10x32xf32>
    %c0_112 = arith.constant 0 : index
    %c0_113 = arith.constant 0 : index
    %246 = vector.load %arg14[%c0_112, %c0_113] : memref<32x32xf32, #tpu.memory_space<vmem>>, vector<32x32xf32>
    %cst_114 = arith.constant dense<0.000000e+00> : vector<10x32xf32>
    %247 = tpu.matmul %207, %246, %cst_114 {dimension_numbers = #tpu.dot_dimension_numbers<[1], [0], [0], [1], [0, 0, 1, 1], [], []>} : vector<10x32xf32>, vector<32x32xf32>, vector<10x32xf32> -> vector<10x32xf32>
    %248 = arith.addf %245, %247 : vector<10x32xf32>
    %c0_115 = arith.constant 0 : index
    %c0_116 = arith.constant 0 : index
    %249 = vector.load %arg15[%c0_115, %c0_116] : memref<1x32xf32, #tpu.memory_space<vmem>>, vector<1x32xf32>
    %250 = vector.broadcast %249 : vector<1x32xf32> to vector<10x32xf32>
    %251 = arith.addf %248, %250 : vector<10x32xf32>
    %252 = math.tanh %251 : vector<10x32xf32>
    %c0_117 = arith.constant 0 : index
    %c0_118 = arith.constant 0 : index
    %253 = vector.load %arg16[%c0_117, %c0_118] : memref<32x64xf32, #tpu.memory_space<vmem>>, vector<32x64xf32>
    %cst_119 = arith.constant dense<0.000000e+00> : vector<10x64xf32>
    %254 = tpu.matmul %252, %253, %cst_119 {dimension_numbers = #tpu.dot_dimension_numbers<[1], [0], [0], [1], [0, 0, 1, 1], [], []>} : vector<10x32xf32>, vector<32x64xf32>, vector<10x64xf32> -> vector<10x64xf32>
    %c0_120 = arith.constant 0 : index
    %c0_121 = arith.constant 0 : index
    %255 = vector.load %arg17[%c0_120, %c0_121] : memref<1x64xf32, #tpu.memory_space<vmem>>, vector<1x64xf32>
    %256 = vector.broadcast %255 : vector<1x64xf32> to vector<10x64xf32>
    %257 = arith.addf %254, %256 : vector<10x64xf32>
    %c0_122 = arith.constant 0 : index
    %c0_123 = arith.constant 0 : index
    %258 = vector.load %arg18[%c0_122, %c0_123] : memref<10x64xf32, #tpu.memory_space<vmem>>, vector<10x64xf32>
    tpu.vector_store %arg18[%c0_122, %c0_123], %257 {strides = array<i32>} : memref<10x64xf32, #tpu.memory_space<vmem>>, vector<10x64xf32>,
    return
  }
}

</mosaic_0001>

<llo_original>
// kernel: decoder_forward.1
$region0: #{decoder_forward.1}
  #allocation0 [shape = 'u32[]', space=smem, size = 0x4, offset = 0x4, fixed_abs, tag = 'smem constant byte address 0x4 - core index']
  #allocation1 [shape = 'u32[72,128]{1,0:T(1,128)}', space=vmem, size = 0x9000, scoped, tag = 'internal scratch']
  #allocation2 [shape = 'f32[2,5,32]{2,1,0:T(8,128)}', space=vmem, size = 0x2000, scoped, tag = 'scratch operand']
  %s0 = inlined_call_operand.vmem [shape: f32[10,16], index: 0, kind: input, shape index: {}]
  %s1 = inlined_call_operand.vmem [shape: f32[2,32], index: 1, kind: input, shape index: {}]
  %s2 = inlined_call_operand.vmem [shape: f32[3,16,32], index: 2, kind: input, shape index: {}]
  %s3 = inlined_call_operand.vmem [shape: f32[3,32,32], index: 3, kind: input, shape index: {}]
  %s4 = inlined_call_operand.vmem [shape: f32[3,1,32], index: 4, kind: input, shape index: {}]
  %s5 = inlined_call_operand.vmem [shape: f32[3,1,32], index: 5, kind: input, shape index: {}]
  %s6 = inlined_call_operand.vmem [shape: f32[2,7,64], index: 6, kind: input, shape index: {}]
  %s7 = inlined_call_operand.vmem [shape: f32[14,64], index: 7, kind: input, shape index: {}]
  %s8 = inlined_call_operand.vmem [shape: f32[2,1,7], index: 8, kind: input, shape index: {}]
  %s9 = inlined_call_operand.vmem [shape: f32[64,32], index: 9, kind: input, shape index: {}]
  %s10 = inlined_call_operand.vmem [shape: f32[32,32], index: 10, kind: input, shape index: {}]
  %s11 = inlined_call_operand.vmem [shape: f32[1,32], index: 11, kind: input, shape index: {}]
  %s12 = inlined_call_operand.vmem [shape: f32[1,32], index: 12, kind: input, shape index: {}]
  %s13 = inlined_call_operand.vmem [shape: f32[64,32], index: 13, kind: input, shape index: {}]
  %s14 = inlined_call_operand.vmem [shape: f32[32,32], index: 14, kind: input, shape index: {}]
  %s15 = inlined_call_operand.vmem [shape: f32[1,32], index: 15, kind: input, shape index: {}]
  %s16 = inlined_call_operand.vmem [shape: f32[32,64], index: 16, kind: input, shape index: {}]
  %s17 = inlined_call_operand.vmem [shape: f32[1,64], index: 17, kind: input, shape index: {}]
  %s18 = inlined_call_operand.vmem [shape: f32[10,64], index: 18, kind: output, shape index: {0}]
  %s19 = inlined_call_operand.hbm [shape: f32[2,32], index: 19, kind: output, shape index: {1}]
  %20 = xla_tuple %s18, %s19
  %s21 = sld [smem:[#allocation0]]
  $region90: #{decoder_forward.1} parent=0
    _
  %s23 = ssub.s32 1, %s21
  %s24 = scalar_select 0, %s23, %s21
  $region1: #{decoder_forward.1} parent=0
    #allocation3 [shape = 'u8[1024]{0}', space=vmem, size = 0x400, scoped, tag = 'output window, operand 1, single buffered']
    #allocation4 [shape = 's32[1]{0}', space=sflag, size = 0x4, scoped, tag = 'scoped memory for decoder_forward.1']
    %25 = vsyncpa [#allocation4], 0
    // Predicated region
    $region2: #{decoder_forward.1} parent=1 // pred_check
      _
    $region3: #{decoder_forward.1} parent=1 // pred_check_branch
      %27 = sbr.rel (0) target = $region5
    $region4: #{decoder_forward.1} parent=1 // pred_region
      _
    $region5: #{decoder_forward.1} parent=1 // pred_fallthru
      _
    // Predicated region
    $region6: #{decoder_forward.1} parent=1 // pred_check
      _
    $region7: #{decoder_forward.1} parent=1 // pred_check_branch
      %29 = sbr.rel (0) target = $region9
    $region8: #{decoder_forward.1} parent=1 // pred_region
      _
    $region9: #{decoder_forward.1} parent=1 // pred_fallthru
      _
    // Predicated region
    $region10: #{decoder_forward.1} parent=1 // pred_check
      _
    $region11: #{decoder_forward.1} parent=1 // pred_check_branch
      %31 = sbr.rel (0) target = $region13
    $region12: #{decoder_forward.1} parent=1 // pred_region
      _
    $region13: #{decoder_forward.1} parent=1 // pred_fallthru
      _
    // Predicated region
    $region14: #{decoder_forward.1} parent=1 // pred_check
      _
    $region15: #{decoder_forward.1} parent=1 // pred_check_branch
      %33 = sbr.rel (0) target = $region17
    $region16: #{decoder_forward.1} parent=1 // pred_region
      _
    $region17: #{decoder_forward.1} parent=1 // pred_fallthru
      _
    // Predicated region
    $region18: #{decoder_forward.1} parent=1 // pred_check
      _
    $region19: #{decoder_forward.1} parent=1 // pred_check_branch
      %35 = sbr.rel (0) target = $region21
    $region20: #{decoder_forward.1} parent=1 // pred_region
      _
    $region21: #{decoder_forward.1} parent=1 // pred_fallthru
      _
    // Predicated region
    $region22: #{decoder_forward.1} parent=1 // pred_check
      _
    $region23: #{decoder_forward.1} parent=1 // pred_check_branch
      %37 = sbr.rel (0) target = $region25
    $region24: #{decoder_forward.1} parent=1 // pred_region
      _
    $region25: #{decoder_forward.1} parent=1 // pred_fallthru
      _
    // Predicated region
    $region26: #{decoder_forward.1} parent=1 // pred_check
      _
    $region27: #{decoder_forward.1} parent=1 // pred_check_branch
      %39 = sbr.rel (0) target = $region29
    $region28: #{decoder_forward.1} parent=1 // pred_region
      _
    $region29: #{decoder_forward.1} parent=1 // pred_fallthru
      _
    // Predicated region
    $region30: #{decoder_forward.1} parent=1 // pred_check
      _
    $region31: #{decoder_forward.1} parent=1 // pred_check_branch
      %41 = sbr.rel (0) target = $region33
    $region32: #{decoder_forward.1} parent=1 // pred_region
      _
    $region33: #{decoder_forward.1} parent=1 // pred_fallthru
      _
    // Predicated region
    $region34: #{decoder_forward.1} parent=1 // pred_check
      _
    $region35: #{decoder_forward.1} parent=1 // pred_check_branch
      %43 = sbr.rel (0) target = $region37
    $region36: #{decoder_forward.1} parent=1 // pred_region
      _
    $region37: #{decoder_forward.1} parent=1 // pred_fallthru
      _
    // Predicated region
    $region38: #{decoder_forward.1} parent=1 // pred_check
      _
    $region39: #{decoder_forward.1} parent=1 // pred_check_branch
      %45 = sbr.rel (0) target = $region41
    $region40: #{decoder_forward.1} parent=1 // pred_region
      _
    $region41: #{decoder_forward.1} parent=1 // pred_fallthru
      _
    // Predicated region
    $region42: #{decoder_forward.1} parent=1 // pred_check
      _
    $region43: #{decoder_forward.1} parent=1 // pred_check_branch
      %47 = sbr.rel (0) target = $region45
    $region44: #{decoder_forward.1} parent=1 // pred_region
      _
    $region45: #{decoder_forward.1} parent=1 // pred_fallthru
      _
    // Predicated region
    $region46: #{decoder_forward.1} parent=1 // pred_check
      _
    $region47: #{decoder_forward.1} parent=1 // pred_check_branch
      %49 = sbr.rel (0) target = $region49
    $region48: #{decoder_forward.1} parent=1 // pred_region
      _
    $region49: #{decoder_forward.1} parent=1 // pred_fallthru
      _
    // Predicated region
    $region50: #{decoder_forward.1} parent=1 // pred_check
      _
    $region51: #{decoder_forward.1} parent=1 // pred_check_branch
      %51 = sbr.rel (0) target = $region53
    $region52: #{decoder_forward.1} parent=1 // pred_region
      _
    $region53: #{decoder_forward.1} parent=1 // pred_fallthru
      _
    // Predicated region
    $region54: #{decoder_forward.1} parent=1 // pred_check
      _
    $region55: #{decoder_forward.1} parent=1 // pred_check_branch
      %53 = sbr.rel (0) target = $region57
    $region56: #{decoder_forward.1} parent=1 // pred_region
      _
    $region57: #{decoder_forward.1} parent=1 // pred_fallthru
      _
    // Predicated region
    $region58: #{decoder_forward.1} parent=1 // pred_check
      _
    $region59: #{decoder_forward.1} parent=1 // pred_check_branch
      %55 = sbr.rel (0) target = $region61
    $region60: #{decoder_forward.1} parent=1 // pred_region
      _
    $region61: #{decoder_forward.1} parent=1 // pred_fallthru
      _
    // Predicated region
    $region62: #{decoder_forward.1} parent=1 // pred_check
      _
    $region63: #{decoder_forward.1} parent=1 // pred_check_branch
      %57 = sbr.rel (0) target = $region65
    $region64: #{decoder_forward.1} parent=1 // pred_region
      _
    $region65: #{decoder_forward.1} parent=1 // pred_fallthru
      _
    // Predicated region
    $region66: #{decoder_forward.1} parent=1 // pred_check
      _
    $region67: #{decoder_forward.1} parent=1 // pred_check_branch
      %59 = sbr.rel (0) target = $region69
    $region68: #{decoder_forward.1} parent=1 // pred_region
      _
    $region69: #{decoder_forward.1} parent=1 // pred_fallthru
      _
    // Predicated region
    $region70: #{decoder_forward.1} parent=1 // pred_check
      _
    $region71: #{decoder_forward.1} parent=1 // pred_check_branch
      %61 = sbr.rel (0) target = $region73
    $region72: #{decoder_forward.1} parent=1 // pred_region
      _
    $region73: #{decoder_forward.1} parent=1 // pred_fallthru
      _
    %v62 = vld [vmem:[%s0] sm:$0xff]
    %v63 = vld [vmem:[%s0 + $0x8] sm:$0x3]
    %v64 = vld [vmem:[%s2] sm:$0xff]
    %v65 = vld [vmem:[%s2 + $0x8] sm:$0xff]
    %v66 = vld [vmem:[%s4] sm:$0x1]
    %v68 = vperm.slane %v66, 0
    %vm70 = vcmask 130048
    %v72 = vsel %vm70, %v62, 0
    %v75 = vsel %vm70, %v63, 0
    %77 = vmatpush.msra.mxu0 0.0
    %78 = vmatpush.msra.mxu0 0.0
    %79 = vmatpush.msra.mxu0 0.0
    %80 = vmatpush.msra.mxu0 0.0
    %81 = vmatpush.msra.mxu0 0.0
    %82 = vmatpush.msra.mxu0 0.0
    %83 = vmatpush.msra.mxu0 0.0
    %84 = vmatpush.msra.mxu0 0.0
    %85 = vmatpush.msra.mxu0 0.0
    %86 = vmatpush.msra.mxu0 0.0
    %87 = vmatpush.msra.mxu0 0.0
    %88 = vmatpush.msra.mxu0 0.0
    %89 = vmatpush.msra.mxu0 0.0
    %90 = vmatpush.msra.mxu0 0.0
    %91 = vmatpush.msra.mxu0 %v65
    %92 = vmatpush.msra.mxu0 %v64
    %93 = vmatmul.f32.gmra.mxu0 %v72
    %v94 = vpop.f32.mrf.mxu0
    %v95 = vadd.f32 %v68, %v94
    %96 = vmatmul.f32.gmra.mxu0 %v75
    %v97 = vpop.f32.mrf.mxu0
    %v98 = vadd.f32 %v68, %v97
    %99 = vdwg.mxu0
    %s100 = scalar_lea.vmem %s2, 16
    %v101 = vld [vmem:[%s100] sm:$0xff]
    %v102 = vld [vmem:[%s100 + $0x8] sm:$0xff]
    %s103 = scalar_lea.vmem %s4, 1
    %v104 = vld [vmem:[%s103] sm:$0x1]
    %v106 = vperm.slane %v104, 0
    %108 = vmatpush.msra.mxu0 0.0
    %109 = vmatpush.msra.mxu0 0.0
    %110 = vmatpush.msra.mxu0 0.0
    %111 = vmatpush.msra.mxu0 0.0
    %112 = vmatpush.msra.mxu0 0.0
    %113 = vmatpush.msra.mxu0 0.0
    %114 = vmatpush.msra.mxu0 0.0
    %115 = vmatpush.msra.mxu0 0.0
    %116 = vmatpush.msra.mxu0 0.0
    %117 = vmatpush.msra.mxu0 0.0
    %118 = vmatpush.msra.mxu0 0.0
    %119 = vmatpush.msra.mxu0 0.0
    %120 = vmatpush.msra.mxu0 0.0
    %121 = vmatpush.msra.mxu0 0.0
    %122 = vmatpush.msra.mxu0 %v102
    %123 = vmatpush.msra.mxu0 %v101
    %124 = vmatmul.f32.gmra.mxu0 %v72
    %v125 = vpop.f32.mrf.mxu0
    %v126 = vadd.f32 %v106, %v125
    %127 = vmatmul.f32.gmra.mxu0 %v75
    %v128 = vpop.f32.mrf.mxu0
    %v129 = vadd.f32 %v106, %v128
    %130 = vdwg.mxu0
    %s131 = scalar_lea.vmem %s2, 32
    %v132 = vld [vmem:[%s131] sm:$0xff]
    %v133 = vld [vmem:[%s131 + $0x8] sm:$0xff]
    %s134 = scalar_lea.vmem %s4, 2
    %v135 = vld [vmem:[%s134] sm:$0x1]
    %v137 = vperm.slane %v135, 0
    %139 = vmatpush.msra.mxu0 0.0
    %140 = vmatpush.msra.mxu0 0.0
    %141 = vmatpush.msra.mxu0 0.0
    %142 = vmatpush.msra.mxu0 0.0
    %143 = vmatpush.msra.mxu0 0.0
    %144 = vmatpush.msra.mxu0 0.0
    %145 = vmatpush.msra.mxu0 0.0
    %146 = vmatpush.msra.mxu0 0.0
    %147 = vmatpush.msra.mxu0 0.0
    %148 = vmatpush.msra.mxu0 0.0
    %149 = vmatpush.msra.mxu0 0.0
    %150 = vmatpush.msra.mxu0 0.0
    %151 = vmatpush.msra.mxu0 0.0
    %152 = vmatpush.msra.mxu0 0.0
    %153 = vmatpush.msra.mxu0 %v133
    %154 = vmatpush.msra.mxu0 %v132
    %155 = vmatmul.f32.gmra.mxu0 %v72
    %v156 = vpop.f32.mrf.mxu0
    %v157 = vadd.f32 %v137, %v156
    %158 = vmatmul.f32.gmra.mxu0 %v75
    %v159 = vpop.f32.mrf.mxu0
    %v160 = vadd.f32 %v137, %v159
    %161 = vdwg.mxu0
    %v162 = vld [vmem:[%s3] sm:$0xff]
    %v163 = vld [vmem:[%s3 + $0x8] sm:$0xff]
    %v164 = vld [vmem:[%s3 + $0x10] sm:$0xff]
    %v165 = vld [vmem:[%s3 + $0x18] sm:$0xff]
    %s166 = scalar_lea.vmem %s3, 32
    %v167 = vld [vmem:[%s166] sm:$0xff]
    %v168 = vld [vmem:[%s166 + $0x8] sm:$0xff]
    %v169 = vld [vmem:[%s166 + $0x10] sm:$0xff]
    %v170 = vld [vmem:[%s166 + $0x18] sm:$0xff]
    %s171 = scalar_lea.vmem %s3, 64
    %v172 = vld [vmem:[%s171] sm:$0xff]
    %v173 = vld [vmem:[%s171 + $0x8] sm:$0xff]
    %v174 = vld [vmem:[%s171 + $0x10] sm:$0xff]
    %v175 = vld [vmem:[%s171 + $0x18] sm:$0xff]
    %v176 = vld [vmem:[%s5] sm:$0x1]
    %s177 = scalar_lea.vmem %s5, 1
    %v178 = vld [vmem:[%s177] sm:$0x1]
    %s179 = scalar_lea.vmem %s5, 2
    %v180 = vld [vmem:[%s179] sm:$0x1]
    %v181 = vld [vmem:[%s1] sm:$0x3]
    %v183 = vperm.slane %v176, 0
    %vm185 = vcmask 261120
    %v187 = vsel %vm185, %v181, 0
    %189 = vmatpush.msra.mxu0 0.0
    %190 = vmatpush.msra.mxu0 0.0
    %191 = vmatpush.msra.mxu0 0.0
    %192 = vmatpush.msra.mxu0 0.0
    %193 = vmatpush.msra.mxu0 0.0
    %194 = vmatpush.msra.mxu0 0.0
    %195 = vmatpush.msra.mxu0 0.0
    %196 = vmatpush.msra.mxu0 0.0
    %197 = vmatpush.msra.mxu0 0.0
    %198 = vmatpush.msra.mxu0 0.0
    %199 = vmatpush.msra.mxu0 0.0
    %200 = vmatpush.msra.mxu0 0.0
    %201 = vmatpush.msra.mxu0 %v165
    %202 = vmatpush.msra.mxu0 %v164
    %203 = vmatpush.msra.mxu0 %v163
    %204 = vmatpush.msra.mxu0 %v162
    %205 = vmatmul.f32.gmra.mxu0 %v187
    %v206 = vpop.f32.mrf.mxu0
    %v207 = vadd.f32 %v183, %v206
    %208 = vdwg.mxu0
    %v210 = vperm.slane %v178, 0
    %212 = vmatpush.msra.mxu0 0.0
    %213 = vmatpush.msra.mxu0 0.0
    %214 = vmatpush.msra.mxu0 0.0
    %215 = vmatpush.msra.mxu0 0.0
    %216 = vmatpush.msra.mxu0 0.0
    %217 = vmatpush.msra.mxu0 0.0
    %218 = vmatpush.msra.mxu0 0.0
    %219 = vmatpush.msra.mxu0 0.0
    %220 = vmatpush.msra.mxu0 0.0
    %221 = vmatpush.msra.mxu0 0.0
    %222 = vmatpush.msra.mxu0 0.0
    %223 = vmatpush.msra.mxu0 0.0
    %224 = vmatpush.msra.mxu0 %v170
    %225 = vmatpush.msra.mxu0 %v169
    %226 = vmatpush.msra.mxu0 %v168
    %227 = vmatpush.msra.mxu0 %v167
    %228 = vmatmul.f32.gmra.mxu0 %v187
    %v229 = vpop.f32.mrf.mxu0
    %v230 = vadd.f32 %v210, %v229
    %231 = vdwg.mxu0
    %v233 = vperm.slane %v180, 0
    %235 = vmatpush.msra.mxu0 0.0
    %236 = vmatpush.msra.mxu0 0.0
    %237 = vmatpush.msra.mxu0 0.0
    %238 = vmatpush.msra.mxu0 0.0
    %239 = vmatpush.msra.mxu0 0.0
    %240 = vmatpush.msra.mxu0 0.0
    %241 = vmatpush.msra.mxu0 0.0
    %242 = vmatpush.msra.mxu0 0.0
    %243 = vmatpush.msra.mxu0 0.0
    %244 = vmatpush.msra.mxu0 0.0
    %245 = vmatpush.msra.mxu0 0.0
    %246 = vmatpush.msra.mxu0 0.0
    %247 = vmatpush.msra.mxu0 %v175
    %248 = vmatpush.msra.mxu0 %v174
    %249 = vmatpush.msra.mxu0 %v173
    %250 = vmatpush.msra.mxu0 %v172
    %251 = vmatmul.f32.gmra.mxu0 %v187
    %v252 = vpop.f32.mrf.mxu0
    %v253 = vadd.f32 %v233, %v252
    %254 = vdwg.mxu0
    %v255 = vadd.f32 %v95, %v207
    %v256 = vxor.u32 %v255, 2147483648
    %v257 = vmul.f32 %v256, 1.442695
    %v258 = vpow.pop %v257
    %v259 = vadd.f32 %v258, 1.0
    %v260 = vrcp.pop %v259
    %v261 = vmul.f32 %v259, %v260
    %v262 = vsub.f32 1.0, %v261
    %v263 = vmul.f32 %v260, %v262
    %v264 = vadd.f32 %v260, %v263
    %vm265 = vweird.f32 %v259
    %vm266 = vweird.f32 %v260
    %vm267 = vmor %vm265, %vm266
    %v268 = vsel %vm267, %v260, %v264
    %v269 = vand.u32 2147483647, %v259
    %vm270 = vcmp.eq.f32.partialorder %v269, 8.507059e+37
    %v271 = vand.u32 %v259, 2147483648
    %v272 = vor.u32 1.1754944e-38, %v271
    %v273 = vsel %vm270, %v272, %v268
    %v274 = vmul.f32 1.0, %v273
    %v275 = vadd.f32 %v126, %v230
    %v276 = vxor.u32 %v275, 2147483648
    %v277 = vmul.f32 %v276, 1.442695
    %v278 = vpow.pop %v277
    %v279 = vadd.f32 %v278, 1.0
    %v280 = vrcp.pop %v279
    %v281 = vmul.f32 %v279, %v280
    %v282 = vsub.f32 1.0, %v281
    %v283 = vmul.f32 %v280, %v282
    %v284 = vadd.f32 %v280, %v283
    %vm285 = vweird.f32 %v279
    %vm286 = vweird.f32 %v280
    %vm287 = vmor %vm285, %vm286
    %v288 = vsel %vm287, %v280, %v284
    %v289 = vand.u32 2147483647, %v279
    %vm290 = vcmp.eq.f32.partialorder %v289, 8.507059e+37
    %v291 = vand.u32 %v279, 2147483648
    %v292 = vor.u32 1.1754944e-38, %v291
    %v293 = vsel %vm290, %v292, %v288
    %v294 = vmul.f32 1.0, %v293
    %v295 = vmul.f32 %v274, %v253
    %v296 = vadd.f32 %v157, %v295
    %v297 = vtanh.pop %v296
    %v298 = vsub.f32 1.0, %v294
    %v299 = vmul.f32 %v298, %v297
    %v300 = vmul.f32 %v294, %v181
    %v301 = vadd.f32 %v299, %v300
    %v303 = vrot.slane %v301, 1
    %vm305 = vcmask 253952
    %306 = vst.msk [vmem:[#allocation2] sm:$0x1] %vm305, %v301
    %307 = vst.msk [vmem:[#allocation2 + $0x8] sm:$0x1] %vm305, %v303
    %v308 = vsel %vm185, %v301, 0
    %310 = vmatpush.msra.mxu0 0.0
    %311 = vmatpush.msra.mxu0 0.0
    %312 = vmatpush.msra.mxu0 0.0
    %313 = vmatpush.msra.mxu0 0.0
    %314 = vmatpush.msra.mxu0 0.0
    %315 = vmatpush.msra.mxu0 0.0
    %316 = vmatpush.msra.mxu0 0.0
    %317 = vmatpush.msra.mxu0 0.0
    %318 = vmatpush.msra.mxu0 0.0
    %319 = vmatpush.msra.mxu0 0.0
    %320 = vmatpush.msra.mxu0 0.0
    %321 = vmatpush.msra.mxu0 0.0
    %322 = vmatpush.msra.mxu0 %v165
    %323 = vmatpush.msra.mxu0 %v164
    %324 = vmatpush.msra.mxu0 %v163
    %325 = vmatpush.msra.mxu0 %v162
    %326 = vmatmul.f32.gmra.mxu0 %v308
    %v327 = vpop.f32.mrf.mxu0
    %v328 = vadd.f32 %v183, %v327
    %329 = vdwg.mxu0
    %330 = vmatpush.msra.mxu0 0.0
    %331 = vmatpush.msra.mxu0 0.0
    %332 = vmatpush.msra.mxu0 0.0
    %333 = vmatpush.msra.mxu0 0.0
    %334 = vmatpush.msra.mxu0 0.0
    %335 = vmatpush.msra.mxu0 0.0
    %336 = vmatpush.msra.mxu0 0.0
    %337 = vmatpush.msra.mxu0 0.0
    %338 = vmatpush.msra.mxu0 0.0
    %339 = vmatpush.msra.mxu0 0.0
    %340 = vmatpush.msra.mxu0 0.0
    %341 = vmatpush.msra.mxu0 0.0
    %342 = vmatpush.msra.mxu0 %v170
    %343 = vmatpush.msra.mxu0 %v169
    %344 = vmatpush.msra.mxu0 %v168
    %345 = vmatpush.msra.mxu0 %v167
    %346 = vmatmul.f32.gmra.mxu0 %v308
    %v347 = vpop.f32.mrf.mxu0
    %v348 = vadd.f32 %v210, %v347
    %349 = vdwg.mxu0
    %350 = vmatpush.msra.mxu0 0.0
    %351 = vmatpush.msra.mxu0 0.0
    %352 = vmatpush.msra.mxu0 0.0
    %353 = vmatpush.msra.mxu0 0.0
    %354 = vmatpush.msra.mxu0 0.0
    %355 = vmatpush.msra.mxu0 0.0
    %356 = vmatpush.msra.mxu0 0.0
    %357 = vmatpush.msra.mxu0 0.0
    %358 = vmatpush.msra.mxu0 0.0
    %359 = vmatpush.msra.mxu0 0.0
    %360 = vmatpush.msra.mxu0 0.0
    %361 = vmatpush.msra.mxu0 0.0
    %362 = vmatpush.msra.mxu0 %v175
    %363 = vmatpush.msra.mxu0 %v174
    %364 = vmatpush.msra.mxu0 %v173
    %365 = vmatpush.msra.mxu0 %v172
    %366 = vmatmul.f32.gmra.mxu0 %v308
    %v367 = vpop.f32.mrf.mxu0
    %v368 = vadd.f32 %v233, %v367
    %369 = vdwg.mxu0
    %v371 = vrot.slane %v328, 6
    %v373 = vadd.f32 %v95, %v371
    %v374 = vxor.u32 %v373, 2147483648
    %v375 = vmul.f32 %v374, 1.442695
    %v376 = vpow.pop %v375
    %v377 = vadd.f32 %v376, 1.0
    %v378 = vrcp.pop %v377
    %v379 = vmul.f32 %v377, %v378
    %v380 = vsub.f32 1.0, %v379
    %v381 = vmul.f32 %v378, %v380
    %v382 = vadd.f32 %v378, %v381
    %vm383 = vweird.f32 %v377
    %vm384 = vweird.f32 %v378
    %vm385 = vmor %vm383, %vm384
    %v386 = vsel %vm385, %v378, %v382
    %v387 = vand.u32 2147483647, %v377
    %vm388 = vcmp.eq.f32.partialorder %v387, 8.507059e+37
    %v389 = vand.u32 %v377, 2147483648
    %v390 = vor.u32 1.1754944e-38, %v389
    %v391 = vsel %vm388, %v390, %v386
    %v392 = vmul.f32 1.0, %v391
    %v394 = vrot.slane %v348, 6
    %v396 = vadd.f32 %v126, %v394
    %v397 = vxor.u32 %v396, 2147483648
    %v398 = vmul.f32 %v397, 1.442695
    %v399 = vpow.pop %v398
    %v400 = vadd.f32 %v399, 1.0
    %v401 = vrcp.pop %v400
    %v402 = vmul.f32 %v400, %v401
    %v403 = vsub.f32 1.0, %v402
    %v404 = vmul.f32 %v401, %v403
    %v405 = vadd.f32 %v401, %v404
    %vm406 = vweird.f32 %v400
    %vm407 = vweird.f32 %v401
    %vm408 = vmor %vm406, %vm407
    %v409 = vsel %vm408, %v401, %v405
    %v410 = vand.u32 2147483647, %v400
    %vm411 = vcmp.eq.f32.partialorder %v410, 8.507059e+37
    %v412 = vand.u32 %v400, 2147483648
    %v413 = vor.u32 1.1754944e-38, %v412
    %v414 = vsel %vm411, %v413, %v409
    %v415 = vmul.f32 1.0, %v414
    %v417 = vrot.slane %v368, 6
    %v419 = vmul.f32 %v392, %v417
    %v420 = vadd.f32 %v157, %v419
    %v421 = vtanh.pop %v420
    %v422 = vsub.f32 1.0, %v415
    %v423 = vmul.f32 %v422, %v421
    %v424 = vrot.slane %v301, 6
    %v426 = vmul.f32 %v415, %v424
    %v427 = vadd.f32 %v423, %v426
    %429 = vst [vmem:[#allocation1] sm:$0xff] %v427
    %s430 = scalar_lea.vmem [#allocation1], 2
    %v431 = vld [vmem:[%s430] ss:$9 sm:$0xff]
    %s432 = scalar_lea.vmem [#allocation1], 3
    %v433 = vld [vmem:[%s432] ss:$9 sm:$0xff]
    %436 = vst.msk [vmem:[#allocation2 + $0x1] sm:$0x1] %vm305, %v431
    %437 = vst.msk [vmem:[#allocation2 + $0x9] sm:$0x1] %vm305, %v433
    %v438 = vrot.slane %v427, 2
    %v439 = vsel %vm185, %v438, 0
    %441 = vmatpush.msra.mxu0 0.0
    %442 = vmatpush.msra.mxu0 0.0
    %443 = vmatpush.msra.mxu0 0.0
    %444 = vmatpush.msra.mxu0 0.0
    %445 = vmatpush.msra.mxu0 0.0
    %446 = vmatpush.msra.mxu0 0.0
    %447 = vmatpush.msra.mxu0 0.0
    %448 = vmatpush.msra.mxu0 0.0
    %449 = vmatpush.msra.mxu0 0.0
    %450 = vmatpush.msra.mxu0 0.0
    %451 = vmatpush.msra.mxu0 0.0
    %452 = vmatpush.msra.mxu0 0.0
    %453 = vmatpush.msra.mxu0 %v165
    %454 = vmatpush.msra.mxu0 %v164
    %455 = vmatpush.msra.mxu0 %v163
    %456 = vmatpush.msra.mxu0 %v162
    %457 = vmatmul.f32.gmra.mxu0 %v439
    %v458 = vpop.f32.mrf.mxu0
    %v459 = vadd.f32 %v183, %v458
    %460 = vdwg.mxu0
    %461 = vmatpush.msra.mxu0 0.0
    %462 = vmatpush.msra.mxu0 0.0
    %463 = vmatpush.msra.mxu0 0.0
    %464 = vmatpush.msra.mxu0 0.0
    %465 = vmatpush.msra.mxu0 0.0
    %466 = vmatpush.msra.mxu0 0.0
    %467 = vmatpush.msra.mxu0 0.0
    %468 = vmatpush.msra.mxu0 0.0
    %469 = vmatpush.msra.mxu0 0.0
    %470 = vmatpush.msra.mxu0 0.0
    %471 = vmatpush.msra.mxu0 0.0
    %472 = vmatpush.msra.mxu0 0.0
    %473 = vmatpush.msra.mxu0 %v170
    %474 = vmatpush.msra.mxu0 %v169
    %475 = vmatpush.msra.mxu0 %v168
    %476 = vmatpush.msra.mxu0 %v167
    %477 = vmatmul.f32.gmra.mxu0 %v439
    %v478 = vpop.f32.mrf.mxu0
    %v479 = vadd.f32 %v210, %v478
    %480 = vdwg.mxu0
    %481 = vmatpush.msra.mxu0 0.0
    %482 = vmatpush.msra.mxu0 0.0
    %483 = vmatpush.msra.mxu0 0.0
    %484 = vmatpush.msra.mxu0 0.0
    %485 = vmatpush.msra.mxu0 0.0
    %486 = vmatpush.msra.mxu0 0.0
    %487 = vmatpush.msra.mxu0 0.0
    %488 = vmatpush.msra.mxu0 0.0
    %489 = vmatpush.msra.mxu0 0.0
    %490 = vmatpush.msra.mxu0 0.0
    %491 = vmatpush.msra.mxu0 0.0
    %492 = vmatpush.msra.mxu0 0.0
    %493 = vmatpush.msra.mxu0 %v175
    %494 = vmatpush.msra.mxu0 %v174
    %495 = vmatpush.msra.mxu0 %v173
    %496 = vmatpush.msra.mxu0 %v172
    %497 = vmatmul.f32.gmra.mxu0 %v439
    %v498 = vpop.f32.mrf.mxu0
    %v499 = vadd.f32 %v233, %v498
    %500 = vdwg.mxu0
    %v502 = vrot.slane %v459, 4
    %v504 = vadd.f32 %v95, %v502
    %v505 = vxor.u32 %v504, 2147483648
    %v506 = vmul.f32 %v505, 1.442695
    %v507 = vpow.pop %v506
    %v508 = vadd.f32 %v507, 1.0
    %v509 = vrcp.pop %v508
    %v510 = vmul.f32 %v508, %v509
    %v511 = vsub.f32 1.0, %v510
    %v512 = vmul.f32 %v509, %v511
    %v513 = vadd.f32 %v509, %v512
    %vm514 = vweird.f32 %v508
    %vm515 = vweird.f32 %v509
    %vm516 = vmor %vm514, %vm515
    %v517 = vsel %vm516, %v509, %v513
    %v518 = vand.u32 2147483647, %v508
    %vm519 = vcmp.eq.f32.partialorder %v518, 8.507059e+37
    %v520 = vand.u32 %v508, 2147483648
    %v521 = vor.u32 1.1754944e-38, %v520
    %v522 = vsel %vm519, %v521, %v517
    %v523 = vmul.f32 1.0, %v522
    %v525 = vrot.slane %v479, 4
    %v527 = vadd.f32 %v126, %v525
    %v528 = vxor.u32 %v527, 2147483648
    %v529 = vmul.f32 %v528, 1.442695
    %v530 = vpow.pop %v529
    %v531 = vadd.f32 %v530, 1.0
    %v532 = vrcp.pop %v531
    %v533 = vmul.f32 %v531, %v532
    %v534 = vsub.f32 1.0, %v533
    %v535 = vmul.f32 %v532, %v534
    %v536 = vadd.f32 %v532, %v535
    %vm537 = vweird.f32 %v531
    %vm538 = vweird.f32 %v532
    %vm539 = vmor %vm537, %vm538
    %v540 = vsel %vm539, %v532, %v536
    %v541 = vand.u32 2147483647, %v531
    %vm542 = vcmp.eq.f32.partialorder %v541, 8.507059e+37
    %v543 = vand.u32 %v531, 2147483648
    %v544 = vor.u32 1.1754944e-38, %v543
    %v545 = vsel %vm542, %v544, %v540
    %v546 = vmul.f32 1.0, %v545
    %v548 = vrot.slane %v499, 4
    %v550 = vmul.f32 %v523, %v548
    %v551 = vadd.f32 %v157, %v550
    %v552 = vtanh.pop %v551
    %v553 = vsub.f32 1.0, %v546
    %v554 = vmul.f32 %v553, %v552
    %v555 = vrot.slane %v427, 6
    %v557 = vmul.f32 %v546, %v555
    %v558 = vadd.f32 %v554, %v557
    %560 = vst [vmem:[#allocation1] sm:$0xff] %v558
    %s561 = scalar_lea.vmem [#allocation1], 4
    %v562 = vld [vmem:[%s561] ss:$9 sm:$0xff]
    %s563 = scalar_lea.vmem [#allocation1], 5
    %v564 = vld [vmem:[%s563] ss:$9 sm:$0xff]
    %567 = vst.msk [vmem:[#allocation2 + $0x2] sm:$0x1] %vm305, %v562
    %568 = vst.msk [vmem:[#allocation2 + $0xa] sm:$0x1] %vm305, %v564
    %v569 = vrot.slane %v558, 4
    %v570 = vsel %vm185, %v569, 0
    %572 = vmatpush.msra.mxu0 0.0
    %573 = vmatpush.msra.mxu0 0.0
    %574 = vmatpush.msra.mxu0 0.0
    %575 = vmatpush.msra.mxu0 0.0
    %576 = vmatpush.msra.mxu0 0.0
    %577 = vmatpush.msra.mxu0 0.0
    %578 = vmatpush.msra.mxu0 0.0
    %579 = vmatpush.msra.mxu0 0.0
    %580 = vmatpush.msra.mxu0 0.0
    %581 = vmatpush.msra.mxu0 0.0
    %582 = vmatpush.msra.mxu0 0.0
    %583 = vmatpush.msra.mxu0 0.0
    %584 = vmatpush.msra.mxu0 %v165
    %585 = vmatpush.msra.mxu0 %v164
    %586 = vmatpush.msra.mxu0 %v163
    %587 = vmatpush.msra.mxu0 %v162
    %588 = vmatmul.f32.gmra.mxu0 %v570
    %v589 = vpop.f32.mrf.mxu0
    %v590 = vadd.f32 %v183, %v589
    %591 = vdwg.mxu0
    %592 = vmatpush.msra.mxu0 0.0
    %593 = vmatpush.msra.mxu0 0.0
    %594 = vmatpush.msra.mxu0 0.0
    %595 = vmatpush.msra.mxu0 0.0
    %596 = vmatpush.msra.mxu0 0.0
    %597 = vmatpush.msra.mxu0 0.0
    %598 = vmatpush.msra.mxu0 0.0
    %599 = vmatpush.msra.mxu0 0.0
    %600 = vmatpush.msra.mxu0 0.0
    %601 = vmatpush.msra.mxu0 0.0
    %602 = vmatpush.msra.mxu0 0.0
    %603 = vmatpush.msra.mxu0 0.0
    %604 = vmatpush.msra.mxu0 %v170
    %605 = vmatpush.msra.mxu0 %v169
    %606 = vmatpush.msra.mxu0 %v168
    %607 = vmatpush.msra.mxu0 %v167
    %608 = vmatmul.f32.gmra.mxu0 %v570
    %v609 = vpop.f32.mrf.mxu0
    %v610 = vadd.f32 %v210, %v609
    %611 = vdwg.mxu0
    %612 = vmatpush.msra.mxu0 0.0
    %613 = vmatpush.msra.mxu0 0.0
    %614 = vmatpush.msra.mxu0 0.0
    %615 = vmatpush.msra.mxu0 0.0
    %616 = vmatpush.msra.mxu0 0.0
    %617 = vmatpush.msra.mxu0 0.0
    %618 = vmatpush.msra.mxu0 0.0
    %619 = vmatpush.msra.mxu0 0.0
    %620 = vmatpush.msra.mxu0 0.0
    %621 = vmatpush.msra.mxu0 0.0
    %622 = vmatpush.msra.mxu0 0.0
    %623 = vmatpush.msra.mxu0 0.0
    %624 = vmatpush.msra.mxu0 %v175
    %625 = vmatpush.msra.mxu0 %v174
    %626 = vmatpush.msra.mxu0 %v173
    %627 = vmatpush.msra.mxu0 %v172
    %628 = vmatmul.f32.gmra.mxu0 %v570
    %v629 = vpop.f32.mrf.mxu0
    %v630 = vadd.f32 %v233, %v629
    %631 = vdwg.mxu0
    %v633 = vrot.slane %v590, 2
    %v635 = vadd.f32 %v95, %v633
    %v636 = vxor.u32 %v635, 2147483648
    %v637 = vmul.f32 %v636, 1.442695
    %v638 = vpow.pop %v637
    %v639 = vadd.f32 %v638, 1.0
    %v640 = vrcp.pop %v639
    %v641 = vmul.f32 %v639, %v640
    %v642 = vsub.f32 1.0, %v641
    %v643 = vmul.f32 %v640, %v642
    %v644 = vadd.f32 %v640, %v643
    %vm645 = vweird.f32 %v639
    %vm646 = vweird.f32 %v640
    %vm647 = vmor %vm645, %vm646
    %v648 = vsel %vm647, %v640, %v644
    %v649 = vand.u32 2147483647, %v639
    %vm650 = vcmp.eq.f32.partialorder %v649, 8.507059e+37
    %v651 = vand.u32 %v639, 2147483648
    %v652 = vor.u32 1.1754944e-38, %v651
    %v653 = vsel %vm650, %v652, %v648
    %v654 = vmul.f32 1.0, %v653
    %v656 = vrot.slane %v610, 2
    %v658 = vadd.f32 %v126, %v656
    %v659 = vxor.u32 %v658, 2147483648
    %v660 = vmul.f32 %v659, 1.442695
    %v661 = vpow.pop %v660
    %v662 = vadd.f32 %v661, 1.0
    %v663 = vrcp.pop %v662
    %v664 = vmul.f32 %v662, %v663
    %v665 = vsub.f32 1.0, %v664
    %v666 = vmul.f32 %v663, %v665
    %v667 = vadd.f32 %v663, %v666
    %vm668 = vweird.f32 %v662
    %vm669 = vweird.f32 %v663
    %vm670 = vmor %vm668, %vm669
    %v671 = vsel %vm670, %v663, %v667
    %v672 = vand.u32 2147483647, %v662
    %vm673 = vcmp.eq.f32.partialorder %v672, 8.507059e+37
    %v674 = vand.u32 %v662, 2147483648
    %v675 = vor.u32 1.1754944e-38, %v674
    %v676 = vsel %vm673, %v675, %v671
    %v677 = vmul.f32 1.0, %v676
    %v679 = vrot.slane %v630, 2
    %v681 = vmul.f32 %v654, %v679
    %v682 = vadd.f32 %v157, %v681
    %v683 = vtanh.pop %v682
    %v684 = vsub.f32 1.0, %v677
    %v685 = vmul.f32 %v684, %v683
    %v686 = vrot.slane %v558, 6
    %v688 = vmul.f32 %v677, %v686
    %v689 = vadd.f32 %v685, %v688
    %691 = vst [vmem:[#allocation1] sm:$0xff] %v689
    %s692 = scalar_lea.vmem [#allocation1], 6
    %v693 = vld [vmem:[%s692] ss:$9 sm:$0xff]
    %s694 = scalar_lea.vmem [#allocation1], 7
    %v695 = vld [vmem:[%s694] ss:$9 sm:$0xff]
    %698 = vst.msk [vmem:[#allocation2 + $0x3] sm:$0x1] %vm305, %v693
    %699 = vst.msk [vmem:[#allocation2 + $0xb] sm:$0x1] %vm305, %v695
    %v700 = vrot.slane %v689, 6
    %v701 = vsel %vm185, %v700, 0
    %703 = vmatpush.msra.mxu0 0.0
    %704 = vmatpush.msra.mxu0 0.0
    %705 = vmatpush.msra.mxu0 0.0
    %706 = vmatpush.msra.mxu0 0.0
    %707 = vmatpush.msra.mxu0 0.0
    %708 = vmatpush.msra.mxu0 0.0
    %709 = vmatpush.msra.mxu0 0.0
    %710 = vmatpush.msra.mxu0 0.0
    %711 = vmatpush.msra.mxu0 0.0
    %712 = vmatpush.msra.mxu0 0.0
    %713 = vmatpush.msra.mxu0 0.0
    %714 = vmatpush.msra.mxu0 0.0
    %715 = vmatpush.msra.mxu0 %v165
    %716 = vmatpush.msra.mxu0 %v164
    %717 = vmatpush.msra.mxu0 %v163
    %718 = vmatpush.msra.mxu0 %v162
    %719 = vmatmul.f32.gmra.mxu0 %v701
    %v720 = vpop.f32.mrf.mxu0
    %v721 = vadd.f32 %v183, %v720
    %722 = vdwg.mxu0
    %723 = vmatpush.msra.mxu0 0.0
    %724 = vmatpush.msra.mxu0 0.0
    %725 = vmatpush.msra.mxu0 0.0
    %726 = vmatpush.msra.mxu0 0.0
    %727 = vmatpush.msra.mxu0 0.0
    %728 = vmatpush.msra.mxu0 0.0
    %729 = vmatpush.msra.mxu0 0.0
    %730 = vmatpush.msra.mxu0 0.0
    %731 = vmatpush.msra.mxu0 0.0
    %732 = vmatpush.msra.mxu0 0.0
    %733 = vmatpush.msra.mxu0 0.0
    %734 = vmatpush.msra.mxu0 0.0
    %735 = vmatpush.msra.mxu0 %v170
    %736 = vmatpush.msra.mxu0 %v169
    %737 = vmatpush.msra.mxu0 %v168
    %738 = vmatpush.msra.mxu0 %v167
    %739 = vmatmul.f32.gmra.mxu0 %v701
    %v740 = vpop.f32.mrf.mxu0
    %v741 = vadd.f32 %v210, %v740
    %742 = vdwg.mxu0
    %743 = vmatpush.msra.mxu0 0.0
    %744 = vmatpush.msra.mxu0 0.0
    %745 = vmatpush.msra.mxu0 0.0
    %746 = vmatpush.msra.mxu0 0.0
    %747 = vmatpush.msra.mxu0 0.0
    %748 = vmatpush.msra.mxu0 0.0
    %749 = vmatpush.msra.mxu0 0.0
    %750 = vmatpush.msra.mxu0 0.0
    %751 = vmatpush.msra.mxu0 0.0
    %752 = vmatpush.msra.mxu0 0.0
    %753 = vmatpush.msra.mxu0 0.0
    %754 = vmatpush.msra.mxu0 0.0
    %755 = vmatpush.msra.mxu0 %v175
    %756 = vmatpush.msra.mxu0 %v174
    %757 = vmatpush.msra.mxu0 %v173
    %758 = vmatpush.msra.mxu0 %v172
    %759 = vmatmul.f32.gmra.mxu0 %v701
    %v760 = vpop.f32.mrf.mxu0
    %v761 = vadd.f32 %v233, %v760
    %762 = vdwg.mxu0
    %v763 = vadd.f32 %v98, %v721
    %v764 = vxor.u32 %v763, 2147483648
    %v765 = vmul.f32 %v764, 1.442695
    %v766 = vpow.pop %v765
    %v767 = vadd.f32 %v766, 1.0
    %v768 = vrcp.pop %v767
    %v769 = vmul.f32 %v767, %v768
    %v770 = vsub.f32 1.0, %v769
    %v771 = vmul.f32 %v768, %v770
    %v772 = vadd.f32 %v768, %v771
    %vm773 = vweird.f32 %v767
    %vm774 = vweird.f32 %v768
    %vm775 = vmor %vm773, %vm774
    %v776 = vsel %vm775, %v768, %v772
    %v777 = vand.u32 2147483647, %v767
    %vm778 = vcmp.eq.f32.partialorder %v777, 8.507059e+37
    %v779 = vand.u32 %v767, 2147483648
    %v780 = vor.u32 1.1754944e-38, %v779
    %v781 = vsel %vm778, %v780, %v776
    %v782 = vmul.f32 1.0, %v781
    %v783 = vadd.f32 %v129, %v741
    %v784 = vxor.u32 %v783, 2147483648
    %v785 = vmul.f32 %v784, 1.442695
    %v786 = vpow.pop %v785
    %v787 = vadd.f32 %v786, 1.0
    %v788 = vrcp.pop %v787
    %v789 = vmul.f32 %v787, %v788
    %v790 = vsub.f32 1.0, %v789
    %v791 = vmul.f32 %v788, %v790
    %v792 = vadd.f32 %v788, %v791
    %vm793 = vweird.f32 %v787
    %vm794 = vweird.f32 %v788
    %vm795 = vmor %vm793, %vm794
    %v796 = vsel %vm795, %v788, %v792
    %v797 = vand.u32 2147483647, %v787
    %vm798 = vcmp.eq.f32.partialorder %v797, 8.507059e+37
    %v799 = vand.u32 %v787, 2147483648
    %v800 = vor.u32 1.1754944e-38, %v799
    %v801 = vsel %vm798, %v800, %v796
    %v802 = vmul.f32 1.0, %v801
    %v803 = vmul.f32 %v782, %v761
    %v804 = vadd.f32 %v160, %v803
    %v805 = vtanh.pop %v804
    %v806 = vsub.f32 1.0, %v802
    %v807 = vmul.f32 %v806, %v805
    %v809 = vmul.f32 %v802, %v700
    %v810 = vadd.f32 %v807, %v809
    %v812 = vrot.slane %v810, 1
    %814 = vst.msk [vmem:[#allocation2 + $0x4] sm:$0x1] %vm305, %v810
    %815 = vst.msk [vmem:[#allocation2 + $0xc] sm:$0x1] %vm305, %v812
    %vm816 = vcmask 254976
    %817 = vst.msk [vmem:[#allocation3] sm:$0x3] %vm816, %v810
    %v818 = vld [vmem:[#allocation2] sm:$0x1f]
    %v819 = vld [vmem:[#allocation2 + $0x8] sm:$0x1f]
    %v822 = vrot.slane %v818, 1
    %v823 = vrot.slane %v818, 2
    %v824 = vrot.slane %v818, 3
    %v825 = vrot.slane %v818, 4
    %v826 = vrot.slane %v819, 1
    %v827 = vrot.slane %v819, 2
    %v828 = vrot.slane %v819, 3
    %v829 = vrot.slane %v819, 4
    %v830 = vld [vmem:[%s7] sm:$0xff]
    %v831 = vld [vmem:[%s7 + $0x8] sm:$0x3f]
    %v832 = vld [vmem:[%s9] sm:$0xff]
    %v833 = vld [vmem:[%s9 + $0x8] sm:$0xff]
    %v834 = vld [vmem:[%s9 + $0x10] sm:$0xff]
    %v835 = vld [vmem:[%s9 + $0x18] sm:$0xff]
    %v836 = vld [vmem:[%s9 + $0x20] sm:$0xff]
    %v837 = vld [vmem:[%s9 + $0x28] sm:$0xff]
    %v838 = vld [vmem:[%s9 + $0x30] sm:$0xff]
    %v839 = vld [vmem:[%s9 + $0x38] sm:$0xff]
    %vm840 = vcmask 523264
    %v842 = vsel %vm840, %v830, 0
    %v845 = vsel %vm840, %v831, 0
    %847 = vmatpush.msra.mxu0 0.0
    %848 = vmatpush.msra.mxu0 0.0
    %849 = vmatpush.msra.mxu0 0.0
    %850 = vmatpush.msra.mxu0 0.0
    %851 = vmatpush.msra.mxu0 0.0
    %852 = vmatpush.msra.mxu0 0.0
    %853 = vmatpush.msra.mxu0 0.0
    %854 = vmatpush.msra.mxu0 0.0
    %855 = vmatpush.msra.mxu0 %v839
    %856 = vmatpush.msra.mxu0 %v838
    %857 = vmatpush.msra.mxu0 %v837
    %858 = vmatpush.msra.mxu0 %v836
    %859 = vmatpush.msra.mxu0 %v835
    %860 = vmatpush.msra.mxu0 %v834
    %861 = vmatpush.msra.mxu0 %v833
    %862 = vmatpush.msra.mxu0 %v832
    %863 = vmatmul.f32.gmra.mxu0 %v842
    %v864 = vpop.f32.mrf.mxu0
    %v865 = vadd.f32 0.0, %v864
    %866 = vmatmul.f32.gmra.mxu0 %v845
    %v867 = vpop.f32.mrf.mxu0
    %v868 = vadd.f32 0.0, %v867
    %869 = vdwg.mxu0
    %v870 = vld [vmem:[%s10] sm:$0xff]
    %v871 = vld [vmem:[%s10 + $0x8] sm:$0xff]
    %v872 = vld [vmem:[%s10 + $0x10] sm:$0xff]
    %v873 = vld [vmem:[%s10 + $0x18] sm:$0xff]
    %v874 = vld [vmem:[%s11] sm:$0x1]
    %v876 = vperm.slane %v874, 0
    %878 = vst [vmem:[#allocation1] ss:$9 sm:$0xff] %v818
    %s879 = scalar_lea.vmem [#allocation1], 1
    %880 = vst [vmem:[%s879] ss:$9 sm:$0xff] %v822
    %s881 = scalar_lea.vmem [#allocation1], 2
    %882 = vst [vmem:[%s881] ss:$9 sm:$0xff] %v823
    %s883 = scalar_lea.vmem [#allocation1], 3
    %884 = vst [vmem:[%s883] ss:$9 sm:$0xff] %v824
    %s885 = scalar_lea.vmem [#allocation1], 4
    %886 = vst [vmem:[%s885] ss:$9 sm:$0xff] %v825
    %s887 = scalar_lea.vmem [#allocation1], 5
    %888 = vst [vmem:[%s887] ss:$9 sm:$0xff] %v819
    %s889 = scalar_lea.vmem [#allocation1], 6
    %890 = vst [vmem:[%s889] ss:$9 sm:$0xff] %v826
    %s891 = scalar_lea.vmem [#allocation1], 7
    %892 = vst [vmem:[%s891] ss:$9 sm:$0xff] %v827
    %v893 = vld [vmem:[#allocation1] sm:$0xff]
    %894 = vst [vmem:[#allocation1] ss:$9 sm:$0xff] %v828
    %895 = vst [vmem:[%s879] ss:$9 sm:$0xff] %v829
    %v896 = vld [vmem:[#allocation1] sm:$0xff]
    %v897 = vsel %vm185, %v893, 0
    %v899 = vsel %vm185, %v896, 0
    %901 = vmatpush.msra.mxu0 0.0
    %902 = vmatpush.msra.mxu0 0.0
    %903 = vmatpush.msra.mxu0 0.0
    %904 = vmatpush.msra.mxu0 0.0
    %905 = vmatpush.msra.mxu0 0.0
    %906 = vmatpush.msra.mxu0 0.0
    %907 = vmatpush.msra.mxu0 0.0
    %908 = vmatpush.msra.mxu0 0.0
    %909 = vmatpush.msra.mxu0 0.0
    %910 = vmatpush.msra.mxu0 0.0
    %911 = vmatpush.msra.mxu0 0.0
    %912 = vmatpush.msra.mxu0 0.0
    %913 = vmatpush.msra.mxu0 %v873
    %914 = vmatpush.msra.mxu0 %v872
    %915 = vmatpush.msra.mxu0 %v871
    %916 = vmatpush.msra.mxu0 %v870
    %917 = vmatmul.f32.gmra.mxu0 %v897
    %v918 = vpop.f32.mrf.mxu0
    %v919 = vadd.f32 %v876, %v918
    %920 = vmatmul.f32.gmra.mxu0 %v899
    %v921 = vpop.f32.mrf.mxu0
    %v922 = vadd.f32 %v876, %v921
    %923 = vdwg.mxu0
    %v926 = vrot.slane %v919, 1
    %v927 = vrot.slane %v919, 2
    %v928 = vrot.slane %v919, 3
    %v929 = vrot.slane %v919, 4
    %v930 = vrot.slane %v919, 5
    %v931 = vrot.slane %v919, 6
    %v932 = vrot.slane %v919, 7
    %v933 = vrot.slane %v922, 1
    %v936 = vrot.slane %v865, 1
    %v937 = vrot.slane %v865, 2
    %v938 = vrot.slane %v865, 3
    %v939 = vrot.slane %v865, 4
    %v940 = vrot.slane %v865, 5
    %v941 = vrot.slane %v865, 6
    %v942 = vrot.slane %v865, 7
    %v943 = vrot.slane %v868, 1
    %v944 = vrot.slane %v868, 2
    %v945 = vrot.slane %v868, 3
    %v946 = vrot.slane %v868, 4
    %v947 = vrot.slane %v868, 5
    %v948 = vperm.slane %v919, 0
    %v949 = vperm.slane %v926, 0
    %v950 = vperm.slane %v927, 0
    %v951 = vperm.slane %v928, 0
    %v952 = vperm.slane %v929, 0
    %v953 = vperm.slane %v930, 0
    %v954 = vperm.slane %v931, 0
    %v955 = vperm.slane %v932, 0
    %v956 = vperm.slane %v922, 0
    %v957 = vperm.slane %v933, 0
    %968 = vst [vmem:[#allocation1] ss:$9 sm:$0xff] %v865
    %s969 = scalar_lea.vmem [#allocation1], 1
    %970 = vst [vmem:[%s969] ss:$9 sm:$0xff] %v936
    %s971 = scalar_lea.vmem [#allocation1], 2
    %972 = vst [vmem:[%s971] ss:$9 sm:$0xff] %v937
    %s973 = scalar_lea.vmem [#allocation1], 3
    %974 = vst [vmem:[%s973] ss:$9 sm:$0xff] %v938
    %s975 = scalar_lea.vmem [#allocation1], 4
    %976 = vst [vmem:[%s975] ss:$9 sm:$0xff] %v939
    %s977 = scalar_lea.vmem [#allocation1], 5
    %978 = vst [vmem:[%s977] ss:$9 sm:$0xff] %v940
    %s979 = scalar_lea.vmem [#allocation1], 6
    %980 = vst [vmem:[%s979] ss:$9 sm:$0xff] %v941
    %v981 = vld [vmem:[#allocation1] sm:$0xff]
    %982 = vst [vmem:[#allocation1] ss:$9 sm:$0xff] %v865
    %983 = vst [vmem:[%s969] ss:$9 sm:$0xff] %v936
    %984 = vst [vmem:[%s971] ss:$9 sm:$0xff] %v937
    %985 = vst [vmem:[%s973] ss:$9 sm:$0xff] %v938
    %986 = vst [vmem:[%s975] ss:$9 sm:$0xff] %v939
    %987 = vst [vmem:[%s977] ss:$9 sm:$0xff] %v940
    %988 = vst [vmem:[%s979] ss:$9 sm:$0xff] %v941
    %v989 = vld [vmem:[#allocation1] sm:$0xff]
    %990 = vst [vmem:[#allocation1] ss:$9 sm:$0xff] %v865
    %991 = vst [vmem:[%s969] ss:$9 sm:$0xff] %v936
    %992 = vst [vmem:[%s971] ss:$9 sm:$0xff] %v937
    %993 = vst [vmem:[%s973] ss:$9 sm:$0xff] %v938
    %994 = vst [vmem:[%s975] ss:$9 sm:$0xff] %v939
    %995 = vst [vmem:[%s977] ss:$9 sm:$0xff] %v940
    %996 = vst [vmem:[%s979] ss:$9 sm:$0xff] %v941
    %v997 = vld [vmem:[#allocation1] sm:$0xff]
    %998 = vst [vmem:[#allocation1] ss:$9 sm:$0xff] %v865
    %999 = vst [vmem:[%s969] ss:$9 sm:$0xff] %v936
    %1000 = vst [vmem:[%s971] ss:$9 sm:$0xff] %v937
    %1001 = vst [vmem:[%s973] ss:$9 sm:$0xff] %v938
    %1002 = vst [vmem:[%s975] ss:$9 sm:$0xff] %v939
    %1003 = vst [vmem:[%s977] ss:$9 sm:$0xff] %v940
    %1004 = vst [vmem:[%s979] ss:$9 sm:$0xff] %v941
    %v1005 = vld [vmem:[#allocation1] sm:$0xff]
    %1006 = vst [vmem:[#allocation1] ss:$9 sm:$0xff] %v865
    %1007 = vst [vmem:[%s969] ss:$9 sm:$0xff] %v936
    %1008 = vst [vmem:[%s971] ss:$9 sm:$0xff] %v937
    %1009 = vst [vmem:[%s973] ss:$9 sm:$0xff] %v938
    %1010 = vst [vmem:[%s975] ss:$9 sm:$0xff] %v939
    %1011 = vst [vmem:[%s977] ss:$9 sm:$0xff] %v940
    %1012 = vst [vmem:[%s979] ss:$9 sm:$0xff] %v941
    %v1013 = vld [vmem:[#allocation1] sm:$0xff]
    %1014 = vst [vmem:[#allocation1] ss:$9 sm:$0xff] %v942
    %1015 = vst [vmem:[%s969] ss:$9 sm:$0xff] %v868
    %1016 = vst [vmem:[%s971] ss:$9 sm:$0xff] %v943
    %1017 = vst [vmem:[%s973] ss:$9 sm:$0xff] %v944
    %1018 = vst [vmem:[%s975] ss:$9 sm:$0xff] %v945
    %1019 = vst [vmem:[%s977] ss:$9 sm:$0xff] %v946
    %1020 = vst [vmem:[%s979] ss:$9 sm:$0xff] %v947
    %v1021 = vld [vmem:[#allocation1] sm:$0xff]
    %1022 = vst [vmem:[#allocation1] ss:$9 sm:$0xff] %v942
    %1023 = vst [vmem:[%s969] ss:$9 sm:$0xff] %v868
    %1024 = vst [vmem:[%s971] ss:$9 sm:$0xff] %v943
    %1025 = vst [vmem:[%s973] ss:$9 sm:$0xff] %v944
    %1026 = vst [vmem:[%s975] ss:$9 sm:$0xff] %v945
    %1027 = vst [vmem:[%s977] ss:$9 sm:$0xff] %v946
    %1028 = vst [vmem:[%s979] ss:$9 sm:$0xff] %v947
    %v1029 = vld [vmem:[#allocation1] sm:$0xff]
    %1030 = vst [vmem:[#allocation1] ss:$9 sm:$0xff] %v942
    %1031 = vst [vmem:[%s969] ss:$9 sm:$0xff] %v868
    %1032 = vst [vmem:[%s971] ss:$9 sm:$0xff] %v943
    %1033 = vst [vmem:[%s973] ss:$9 sm:$0xff] %v944
    %1034 = vst [vmem:[%s975] ss:$9 sm:$0xff] %v945
    %1035 = vst [vmem:[%s977] ss:$9 sm:$0xff] %v946
    %1036 = vst [vmem:[%s979] ss:$9 sm:$0xff] %v947
    %v1037 = vld [vmem:[#allocation1] sm:$0xff]
    %1038 = vst [vmem:[#allocation1] ss:$9 sm:$0xff] %v942
    %1039 = vst [vmem:[%s969] ss:$9 sm:$0xff] %v868
    %1040 = vst [vmem:[%s971] ss:$9 sm:$0xff] %v943
    %1041 = vst [vmem:[%s973] ss:$9 sm:$0xff] %v944
    %1042 = vst [vmem:[%s975] ss:$9 sm:$0xff] %v945
    %1043 = vst [vmem:[%s977] ss:$9 sm:$0xff] %v946
    %1044 = vst [vmem:[%s979] ss:$9 sm:$0xff] %v947
    %v1045 = vld [vmem:[#allocation1] sm:$0xff]
    %1046 = vst [vmem:[#allocation1] ss:$9 sm:$0xff] %v942
    %1047 = vst [vmem:[%s969] ss:$9 sm:$0xff] %v868
    %1048 = vst [vmem:[%s971] ss:$9 sm:$0xff] %v943
    %1049 = vst [vmem:[%s973] ss:$9 sm:$0xff] %v944
    %1050 = vst [vmem:[%s975] ss:$9 sm:$0xff] %v945
    %1051 = vst [vmem:[%s977] ss:$9 sm:$0xff] %v946
    %1052 = vst [vmem:[%s979] ss:$9 sm:$0xff] %v947
    %v1053 = vld [vmem:[#allocation1] sm:$0xff]
    %v1064 = vadd.f32 %v948, %v981
    %v1065 = vadd.f32 %v949, %v989
    %v1066 = vadd.f32 %v950, %v997
    %v1067 = vadd.f32 %v951, %v1005
    %v1068 = vadd.f32 %v952, %v1013
    %v1069 = vadd.f32 %v953, %v1021
    %v1070 = vadd.f32 %v954, %v1029
    %v1071 = vadd.f32 %v955, %v1037
    %v1072 = vadd.f32 %v956, %v1045
    %v1073 = vadd.f32 %v957, %v1053
    %v1074 = vtanh.pop %v1064
    %v1075 = vtanh.pop %v1065
    %v1076 = vtanh.pop %v1066
    %v1077 = vtanh.pop %v1067
    %v1078 = vtanh.pop %v1068
    %v1079 = vtanh.pop %v1069
    %v1080 = vtanh.pop %v1070
    %v1081 = vtanh.pop %v1071
    %v1082 = vtanh.pop %v1072
    %v1083 = vtanh.pop %v1073
    %v1084 = vld [vmem:[%s12] sm:$0x1]
    %v1086 = vperm.slane %v1084, 0
    %v1088 = vmul.f32 %v1074, %v1086
    %v1089 = vmul.f32 %v1075, %v1086
    %v1090 = vmul.f32 %v1076, %v1086
    %v1091 = vmul.f32 %v1077, %v1086
    %v1092 = vmul.f32 %v1078, %v1086
    %v1093 = vmul.f32 %v1079, %v1086
    %v1094 = vmul.f32 %v1080, %v1086
    %v1095 = vmul.f32 %v1081, %v1086
    %v1096 = vmul.f32 %v1082, %v1086
    %v1097 = vmul.f32 %v1083, %v1086
    %vm1098 = vcmask 260096
    %v1099 = vsel %vm1098, %v1088, 0.0
    %1100 = vadd.xlane.f32.xlu0 %v1099
    %v1101 = vpop.xlane.xlu0 %1100
    %v1102 = vsel %vm1098, %v1089, 0.0
    %1103 = vadd.xlane.f32.xlu0 %v1102
    %v1104 = vpop.xlane.xlu0 %1103
    %v1105 = vsel %vm1098, %v1090, 0.0
    %1106 = vadd.xlane.f32.xlu0 %v1105
    %v1107 = vpop.xlane.xlu0 %1106
    %v1108 = vsel %vm1098, %v1091, 0.0
    %1109 = vadd.xlane.f32.xlu0 %v1108
    %v1110 = vpop.xlane.xlu0 %1109
    %v1111 = vsel %vm1098, %v1092, 0.0
    %1112 = vadd.xlane.f32.xlu0 %v1111
    %v1113 = vpop.xlane.xlu0 %1112
    %v1114 = vsel %vm1098, %v1093, 0.0
    %1115 = vadd.xlane.f32.xlu0 %v1114
    %v1116 = vpop.xlane.xlu0 %1115
    %v1117 = vsel %vm1098, %v1094, 0.0
    %1118 = vadd.xlane.f32.xlu0 %v1117
    %v1119 = vpop.xlane.xlu0 %1118
    %v1120 = vsel %vm1098, %v1095, 0.0
    %1121 = vadd.xlane.f32.xlu0 %v1120
    %v1122 = vpop.xlane.xlu0 %1121
    %v1123 = vsel %vm1098, %v1096, 0.0
    %1124 = vadd.xlane.f32.xlu0 %v1123
    %v1125 = vpop.xlane.xlu0 %1124
    %v1126 = vsel %vm1098, %v1097, 0.0
    %1127 = vadd.xlane.f32.xlu0 %v1126
    %v1128 = vpop.xlane.xlu0 %1127
    %v1129 = vld [vmem:[%s8] sm:$0x1]
    %v1130 = vld [vmem:[%s8 + $0x1] sm:$0x1]
    %v1133 = vperm.slane %v1129, 0
    %v1134 = vperm.slane %v1130, 0
    %v1135 = vlaneseq
    %v1136 = vshrl.u32 %v1135, 7
    %1138 = vset.pattern.permute.xlu0 %v1136
    %1139 = vperm.xlu0 %1138, %v1133
    %v1140 = vpop.permute.xlu0 %1139
    %v1141 = vlaneseq
    %v1142 = vshrl.u32 %v1141, 7
    %1144 = vset.pattern.permute.xlu0 %v1142
    %1145 = vperm.xlu0 %1144, %v1134
    %v1146 = vpop.permute.xlu0 %1145
    %v1149 = vadd.f32 %v1101, %v1140
    %v1150 = vadd.f32 %v1104, %v1140
    %v1151 = vadd.f32 %v1107, %v1140
    %v1152 = vadd.f32 %v1110, %v1140
    %v1153 = vadd.f32 %v1113, %v1140
    %v1154 = vadd.f32 %v1116, %v1146
    %v1155 = vadd.f32 %v1119, %v1146
    %v1156 = vadd.f32 %v1122, %v1146
    %v1157 = vadd.f32 %v1125, %v1146
    %v1158 = vadd.f32 %v1128, %v1146
    %1169 = vset.pattern.permute.xlu0 0
    %1170 = vperm.xlu0 %1169, %v1149
    %v1171 = vpop.permute.xlu0 %1170
    %1172 = vset.pattern.permute.xlu0 0
    %1173 = vperm.xlu0 %1172, %v1150
    %v1174 = vpop.permute.xlu0 %1173
    %1175 = vset.pattern.permute.xlu0 0
    %1176 = vperm.xlu0 %1175, %v1151
    %v1177 = vpop.permute.xlu0 %1176
    %1178 = vset.pattern.permute.xlu0 0
    %1179 = vperm.xlu0 %1178, %v1152
    %v1180 = vpop.permute.xlu0 %1179
    %1181 = vset.pattern.permute.xlu0 0
    %1182 = vperm.xlu0 %1181, %v1153
    %v1183 = vpop.permute.xlu0 %1182
    %1184 = vset.pattern.permute.xlu0 0
    %1185 = vperm.xlu0 %1184, %v1154
    %v1186 = vpop.permute.xlu0 %1185
    %1187 = vset.pattern.permute.xlu0 0
    %1188 = vperm.xlu0 %1187, %v1155
    %v1189 = vpop.permute.xlu0 %1188
    %1190 = vset.pattern.permute.xlu0 0
    %1191 = vperm.xlu0 %1190, %v1156
    %v1192 = vpop.permute.xlu0 %1191
    %1193 = vset.pattern.permute.xlu0 0
    %1194 = vperm.xlu0 %1193, %v1157
    %v1195 = vpop.permute.xlu0 %1194
    %1196 = vset.pattern.permute.xlu0 0
    %1197 = vperm.xlu0 %1196, %v1158
    %v1198 = vpop.permute.xlu0 %1197
    %v1199 = vlaneseq
    %v1200 = vand.u32 %v1199, 127
    %v1201 = vperm.slane %v1171, %v1200
    %v1202 = vperm.slane %v1174, %v1200
    %v1203 = vperm.slane %v1177, %v1200
    %v1204 = vperm.slane %v1180, %v1200
    %v1205 = vperm.slane %v1183, %v1200
    %v1206 = vperm.slane %v1186, %v1200
    %v1207 = vperm.slane %v1189, %v1200
    %v1208 = vperm.slane %v1192, %v1200
    %v1209 = vperm.slane %v1195, %v1200
    %v1210 = vperm.slane %v1198, %v1200
    %vm1211 = vcmask 1041409
    %v1212 = vsel %vm1211, %v1202, %v1201
    %vm1213 = vcmask 1042434
    %v1214 = vsel %vm1213, %v1203, %v1212
    %vm1215 = vcmask 1043459
    %v1216 = vsel %vm1215, %v1204, %v1214
    %vm1217 = vcmask 1044484
    %v1218 = vsel %vm1217, %v1205, %v1216
    %v1219 = vsel %vm1211, %v1207, %v1206
    %v1220 = vsel %vm1213, %v1208, %v1219
    %v1221 = vsel %vm1215, %v1209, %v1220
    %v1222 = vsel %vm1217, %v1210, %v1221
    %vm1225 = vcmask 53248
    %v1226 = vsel %vm1225, %v1218, -inf
    %1227 = vmax.xlane.f32.xlu0 %v1226
    %v1228 = vpop.xlane.xlu0 %1227
    %v1229 = vsel %vm1225, %v1222, -inf
    %1230 = vmax.xlane.f32.xlu0 %v1229
    %v1231 = vpop.xlane.xlu0 %1230
    %v1234 = vperm.slane %v1228, 0
    %v1235 = vperm.slane %v1228, 1
    %v1236 = vperm.slane %v1228, 2
    %v1237 = vperm.slane %v1228, 3
    %v1238 = vperm.slane %v1228, 4
    %v1239 = vperm.slane %v1231, 0
    %v1240 = vperm.slane %v1231, 1
    %v1241 = vperm.slane %v1231, 2
    %v1242 = vperm.slane %v1231, 3
    %v1243 = vperm.slane %v1231, 4
    %v1254 = vsub.f32 %v1149, %v1234
    %v1255 = vsub.f32 %v1150, %v1235
    %v1256 = vsub.f32 %v1151, %v1236
    %v1257 = vsub.f32 %v1152, %v1237
    %v1258 = vsub.f32 %v1153, %v1238
    %v1259 = vsub.f32 %v1154, %v1239
    %v1260 = vsub.f32 %v1155, %v1240
    %v1261 = vsub.f32 %v1156, %v1241
    %v1262 = vsub.f32 %v1157, %v1242
    %v1263 = vsub.f32 %v1158, %v1243
    %v1264 = vmul.f32 %v1254, 1.442695
    %v1265 = vpow.pop %v1264
    %v1266 = vmul.f32 %v1255, 1.442695
    %v1267 = vpow.pop %v1266
    %v1268 = vmul.f32 %v1256, 1.442695
    %v1269 = vpow.pop %v1268
    %v1270 = vmul.f32 %v1257, 1.442695
    %v1271 = vpow.pop %v1270
    %v1272 = vmul.f32 %v1258, 1.442695
    %v1273 = vpow.pop %v1272
    %v1274 = vmul.f32 %v1259, 1.442695
    %v1275 = vpow.pop %v1274
    %v1276 = vmul.f32 %v1260, 1.442695
    %v1277 = vpow.pop %v1276
    %v1278 = vmul.f32 %v1261, 1.442695
    %v1279 = vpow.pop %v1278
    %v1280 = vmul.f32 %v1262, 1.442695
    %v1281 = vpow.pop %v1280
    %v1282 = vmul.f32 %v1263, 1.442695
    %v1283 = vpow.pop %v1282
    %1294 = vset.pattern.permute.xlu0 0
    %1295 = vperm.xlu0 %1294, %v1265
    %v1296 = vpop.permute.xlu0 %1295
    %1297 = vset.pattern.permute.xlu0 0
    %1298 = vperm.xlu0 %1297, %v1267
    %v1299 = vpop.permute.xlu0 %1298
    %1300 = vset.pattern.permute.xlu0 0
    %1301 = vperm.xlu0 %1300, %v1269
    %v1302 = vpop.permute.xlu0 %1301
    %1303 = vset.pattern.permute.xlu0 0
    %1304 = vperm.xlu0 %1303, %v1271
    %v1305 = vpop.permute.xlu0 %1304
    %1306 = vset.pattern.permute.xlu0 0
    %1307 = vperm.xlu0 %1306, %v1273
    %v1308 = vpop.permute.xlu0 %1307
    %1309 = vset.pattern.permute.xlu0 0
    %1310 = vperm.xlu0 %1309, %v1275
    %v1311 = vpop.permute.xlu0 %1310
    %1312 = vset.pattern.permute.xlu0 0
    %1313 = vperm.xlu0 %1312, %v1277
    %v1314 = vpop.permute.xlu0 %1313
    %1315 = vset.pattern.permute.xlu0 0
    %1316 = vperm.xlu0 %1315, %v1279
    %v1317 = vpop.permute.xlu0 %1316
    %1318 = vset.pattern.permute.xlu0 0
    %1319 = vperm.xlu0 %1318, %v1281
    %v1320 = vpop.permute.xlu0 %1319
    %1321 = vset.pattern.permute.xlu0 0
    %1322 = vperm.xlu0 %1321, %v1283
    %v1323 = vpop.permute.xlu0 %1322
    %v1324 = vperm.slane %v1296, %v1200
    %v1325 = vperm.slane %v1299, %v1200
    %v1326 = vperm.slane %v1302, %v1200
    %v1327 = vperm.slane %v1305, %v1200
    %v1328 = vperm.slane %v1308, %v1200
    %v1329 = vperm.slane %v1311, %v1200
    %v1330 = vperm.slane %v1314, %v1200
    %v1331 = vperm.slane %v1317, %v1200
    %v1332 = vperm.slane %v1320, %v1200
    %v1333 = vperm.slane %v1323, %v1200
    %v1334 = vsel %vm1211, %v1325, %v1324
    %v1335 = vsel %vm1213, %v1326, %v1334
    %v1336 = vsel %vm1215, %v1327, %v1335
    %v1337 = vsel %vm1217, %v1328, %v1336
    %v1338 = vsel %vm1211, %v1330, %v1329
    %v1339 = vsel %vm1213, %v1331, %v1338
    %v1340 = vsel %vm1215, %v1332, %v1339
    %v1341 = vsel %vm1217, %v1333, %v1340
    %v1344 = vsel %vm1225, %v1337, 0.0
    %1345 = vadd.xlane.f32.xlu0 %v1344
    %v1346 = vpop.xlane.xlu0 %1345
    %v1347 = vsel %vm1225, %v1341, 0.0
    %1348 = vadd.xlane.f32.xlu0 %v1347
    %v1349 = vpop.xlane.xlu0 %1348
    %v1352 = vperm.slane %v1346, 0
    %v1353 = vperm.slane %v1346, 1
    %v1354 = vperm.slane %v1346, 2
    %v1355 = vperm.slane %v1346, 3
    %v1356 = vperm.slane %v1346, 4
    %v1357 = vperm.slane %v1349, 0
    %v1358 = vperm.slane %v1349, 1
    %v1359 = vperm.slane %v1349, 2
    %v1360 = vperm.slane %v1349, 3
    %v1361 = vperm.slane %v1349, 4
    %v1372 = vrcp.pop %v1352
    %v1373 = vmul.f32 %v1352, %v1372
    %v1374 = vsub.f32 1.0, %v1373
    %v1375 = vmul.f32 %v1372, %v1374
    %v1376 = vadd.f32 %v1372, %v1375
    %vm1377 = vweird.f32 %v1352
    %vm1378 = vweird.f32 %v1372
    %vm1379 = vmor %vm1377, %vm1378
    %v1380 = vsel %vm1379, %v1372, %v1376
    %v1381 = vand.u32 2147483647, %v1352
    %vm1382 = vcmp.eq.f32.partialorder %v1381, 8.507059e+37
    %v1383 = vand.u32 %v1352, 2147483648
    %v1384 = vor.u32 1.1754944e-38, %v1383
    %v1385 = vsel %vm1382, %v1384, %v1380
    %v1386 = vmul.f32 %v1265, %v1385
    %v1387 = vrcp.pop %v1353
    %v1388 = vmul.f32 %v1353, %v1387
    %v1389 = vsub.f32 1.0, %v1388
    %v1390 = vmul.f32 %v1387, %v1389
    %v1391 = vadd.f32 %v1387, %v1390
    %vm1392 = vweird.f32 %v1353
    %vm1393 = vweird.f32 %v1387
    %vm1394 = vmor %vm1392, %vm1393
    %v1395 = vsel %vm1394, %v1387, %v1391
    %v1396 = vand.u32 2147483647, %v1353
    %vm1397 = vcmp.eq.f32.partialorder %v1396, 8.507059e+37
    %v1398 = vand.u32 %v1353, 2147483648
    %v1399 = vor.u32 1.1754944e-38, %v1398
    %v1400 = vsel %vm1397, %v1399, %v1395
    %v1401 = vmul.f32 %v1267, %v1400
    %v1402 = vrcp.pop %v1354
    %v1403 = vmul.f32 %v1354, %v1402
    %v1404 = vsub.f32 1.0, %v1403
    %v1405 = vmul.f32 %v1402, %v1404
    %v1406 = vadd.f32 %v1402, %v1405
    %vm1407 = vweird.f32 %v1354
    %vm1408 = vweird.f32 %v1402
    %vm1409 = vmor %vm1407, %vm1408
    %v1410 = vsel %vm1409, %v1402, %v1406
    %v1411 = vand.u32 2147483647, %v1354
    %vm1412 = vcmp.eq.f32.partialorder %v1411, 8.507059e+37
    %v1413 = vand.u32 %v1354, 2147483648
    %v1414 = vor.u32 1.1754944e-38, %v1413
    %v1415 = vsel %vm1412, %v1414, %v1410
    %v1416 = vmul.f32 %v1269, %v1415
    %v1417 = vrcp.pop %v1355
    %v1418 = vmul.f32 %v1355, %v1417
    %v1419 = vsub.f32 1.0, %v1418
    %v1420 = vmul.f32 %v1417, %v1419
    %v1421 = vadd.f32 %v1417, %v1420
    %vm1422 = vweird.f32 %v1355
    %vm1423 = vweird.f32 %v1417
    %vm1424 = vmor %vm1422, %vm1423
    %v1425 = vsel %vm1424, %v1417, %v1421
    %v1426 = vand.u32 2147483647, %v1355
    %vm1427 = vcmp.eq.f32.partialorder %v1426, 8.507059e+37
    %v1428 = vand.u32 %v1355, 2147483648
    %v1429 = vor.u32 1.1754944e-38, %v1428
    %v1430 = vsel %vm1427, %v1429, %v1425
    %v1431 = vmul.f32 %v1271, %v1430
    %v1432 = vrcp.pop %v1356
    %v1433 = vmul.f32 %v1356, %v1432
    %v1434 = vsub.f32 1.0, %v1433
    %v1435 = vmul.f32 %v1432, %v1434
    %v1436 = vadd.f32 %v1432, %v1435
    %vm1437 = vweird.f32 %v1356
    %vm1438 = vweird.f32 %v1432
    %vm1439 = vmor %vm1437, %vm1438
    %v1440 = vsel %vm1439, %v1432, %v1436
    %v1441 = vand.u32 2147483647, %v1356
    %vm1442 = vcmp.eq.f32.partialorder %v1441, 8.507059e+37
    %v1443 = vand.u32 %v1356, 2147483648
    %v1444 = vor.u32 1.1754944e-38, %v1443
    %v1445 = vsel %vm1442, %v1444, %v1440
    %v1446 = vmul.f32 %v1273, %v1445
    %v1447 = vrcp.pop %v1357
    %v1448 = vmul.f32 %v1357, %v1447
    %v1449 = vsub.f32 1.0, %v1448
    %v1450 = vmul.f32 %v1447, %v1449
    %v1451 = vadd.f32 %v1447, %v1450
    %vm1452 = vweird.f32 %v1357
    %vm1453 = vweird.f32 %v1447
    %vm1454 = vmor %vm1452, %vm1453
    %v1455 = vsel %vm1454, %v1447, %v1451
    %v1456 = vand.u32 2147483647, %v1357
    %vm1457 = vcmp.eq.f32.partialorder %v1456, 8.507059e+37
    %v1458 = vand.u32 %v1357, 2147483648
    %v1459 = vor.u32 1.1754944e-38, %v1458
    %v1460 = vsel %vm1457, %v1459, %v1455
    %v1461 = vmul.f32 %v1275, %v1460
    %v1462 = vrcp.pop %v1358
    %v1463 = vmul.f32 %v1358, %v1462
    %v1464 = vsub.f32 1.0, %v1463
    %v1465 = vmul.f32 %v1462, %v1464
    %v1466 = vadd.f32 %v1462, %v1465
    %vm1467 = vweird.f32 %v1358
    %vm1468 = vweird.f32 %v1462
    %vm1469 = vmor %vm1467, %vm1468
    %v1470 = vsel %vm1469, %v1462, %v1466
    %v1471 = vand.u32 2147483647, %v1358
    %vm1472 = vcmp.eq.f32.partialorder %v1471, 8.507059e+37
    %v1473 = vand.u32 %v1358, 2147483648
    %v1474 = vor.u32 1.1754944e-38, %v1473
    %v1475 = vsel %vm1472, %v1474, %v1470
    %v1476 = vmul.f32 %v1277, %v1475
    %v1477 = vrcp.pop %v1359
    %v1478 = vmul.f32 %v1359, %v1477
    %v1479 = vsub.f32 1.0, %v1478
    %v1480 = vmul.f32 %v1477, %v1479
    %v1481 = vadd.f32 %v1477, %v1480
    %vm1482 = vweird.f32 %v1359
    %vm1483 = vweird.f32 %v1477
    %vm1484 = vmor %vm1482, %vm1483
    %v1485 = vsel %vm1484, %v1477, %v1481
    %v1486 = vand.u32 2147483647, %v1359
    %vm1487 = vcmp.eq.f32.partialorder %v1486, 8.507059e+37
    %v1488 = vand.u32 %v1359, 2147483648
    %v1489 = vor.u32 1.1754944e-38, %v1488
    %v1490 = vsel %vm1487, %v1489, %v1485
    %v1491 = vmul.f32 %v1279, %v1490
    %v1492 = vrcp.pop %v1360
    %v1493 = vmul.f32 %v1360, %v1492
    %v1494 = vsub.f32 1.0, %v1493
    %v1495 = vmul.f32 %v1492, %v1494
    %v1496 = vadd.f32 %v1492, %v1495
    %vm1497 = vweird.f32 %v1360
    %vm1498 = vweird.f32 %v1492
    %vm1499 = vmor %vm1497, %vm1498
    %v1500 = vsel %vm1499, %v1492, %v1496
    %v1501 = vand.u32 2147483647, %v1360
    %vm1502 = vcmp.eq.f32.partialorder %v1501, 8.507059e+37
    %v1503 = vand.u32 %v1360, 2147483648
    %v1504 = vor.u32 1.1754944e-38, %v1503
    %v1505 = vsel %vm1502, %v1504, %v1500
    %v1506 = vmul.f32 %v1281, %v1505
    %v1507 = vrcp.pop %v1361
    %v1508 = vmul.f32 %v1361, %v1507
    %v1509 = vsub.f32 1.0, %v1508
    %v1510 = vmul.f32 %v1507, %v1509
    %v1511 = vadd.f32 %v1507, %v1510
    %vm1512 = vweird.f32 %v1361
    %vm1513 = vweird.f32 %v1507
    %vm1514 = vmor %vm1512, %vm1513
    %v1515 = vsel %vm1514, %v1507, %v1511
    %v1516 = vand.u32 2147483647, %v1361
    %vm1517 = vcmp.eq.f32.partialorder %v1516, 8.507059e+37
    %v1518 = vand.u32 %v1361, 2147483648
    %v1519 = vor.u32 1.1754944e-38, %v1518
    %v1520 = vsel %vm1517, %v1519, %v1515
    %v1521 = vmul.f32 %v1283, %v1520
    %v1522 = vld [vmem:[%s6] sm:$0x7f]
    %v1523 = vld [vmem:[%s6 + $0x8] sm:$0x7f]
    %1529 = vset.pattern.permute.xlu0 0
    %1530 = vperm.xlu0 %1529, %v1386
    %v1531 = vpop.permute.xlu0 %1530
    %1532 = vset.pattern.permute.xlu0 0
    %1533 = vperm.xlu0 %1532, %v1401
    %v1534 = vpop.permute.xlu0 %1533
    %1535 = vset.pattern.permute.xlu0 0
    %1536 = vperm.xlu0 %1535, %v1416
    %v1537 = vpop.permute.xlu0 %1536
    %1538 = vset.pattern.permute.xlu0 0
    %1539 = vperm.xlu0 %1538, %v1431
    %v1540 = vpop.permute.xlu0 %1539
    %1541 = vset.pattern.permute.xlu0 0
    %1542 = vperm.xlu0 %1541, %v1446
    %v1543 = vpop.permute.xlu0 %1542
    %v1544 = vperm.slane %v1531, %v1200
    %v1545 = vperm.slane %v1534, %v1200
    %v1546 = vperm.slane %v1537, %v1200
    %v1547 = vperm.slane %v1540, %v1200
    %v1548 = vperm.slane %v1543, %v1200
    %v1549 = vsel %vm1211, %v1545, %v1544
    %v1550 = vsel %vm1213, %v1546, %v1549
    %v1551 = vsel %vm1215, %v1547, %v1550
    %v1552 = vsel %vm1217, %v1548, %v1551
    %vm1553 = vcmask 56320
    %v1554 = vsel %vm1553, %v1552, 0
    %vm1556 = vcmask 1046528
    %v1558 = vsel %vm1556, %v1522, 0
    %1560 = vmatpush.msra.mxu0 0.0
    %1561 = vmatpush.msra.mxu0 0.0
    %1562 = vmatpush.msra.mxu0 0.0
    %1563 = vmatpush.msra.mxu0 0.0
    %1564 = vmatpush.msra.mxu0 0.0
    %1565 = vmatpush.msra.mxu0 0.0
    %1566 = vmatpush.msra.mxu0 0.0
    %1567 = vmatpush.msra.mxu0 0.0
    %1568 = vmatpush.msra.mxu0 0.0
    %1569 = vmatpush.msra.mxu0 0.0
    %1570 = vmatpush.msra.mxu0 0.0
    %1571 = vmatpush.msra.mxu0 0.0
    %1572 = vmatpush.msra.mxu0 0.0
    %1573 = vmatpush.msra.mxu0 0.0
    %1574 = vmatpush.msra.mxu0 0.0
    %1575 = vmatpush.msra.mxu0 %v1558
    %1576 = vmatmul.f32.gmra.mxu0 %v1554
    %v1577 = vpop.f32.mrf.mxu0
    %v1578 = vadd.f32 0.0, %v1577
    %1579 = vdwg.mxu0
    %1585 = vset.pattern.permute.xlu0 0
    %1586 = vperm.xlu0 %1585, %v1461
    %v1587 = vpop.permute.xlu0 %1586
    %1588 = vset.pattern.permute.xlu0 0
    %1589 = vperm.xlu0 %1588, %v1476
    %v1590 = vpop.permute.xlu0 %1589
    %1591 = vset.pattern.permute.xlu0 0
    %1592 = vperm.xlu0 %1591, %v1491
    %v1593 = vpop.permute.xlu0 %1592
    %1594 = vset.pattern.permute.xlu0 0
    %1595 = vperm.xlu0 %1594, %v1506
    %v1596 = vpop.permute.xlu0 %1595
    %1597 = vset.pattern.permute.xlu0 0
    %1598 = vperm.xlu0 %1597, %v1521
    %v1599 = vpop.permute.xlu0 %1598
    %v1600 = vperm.slane %v1587, %v1200
    %v1601 = vperm.slane %v1590, %v1200
    %v1602 = vperm.slane %v1593, %v1200
    %v1603 = vperm.slane %v1596, %v1200
    %v1604 = vperm.slane %v1599, %v1200
    %v1605 = vsel %vm1211, %v1601, %v1600
    %v1606 = vsel %vm1213, %v1602, %v1605
    %v1607 = vsel %vm1215, %v1603, %v1606
    %v1608 = vsel %vm1217, %v1604, %v1607
    %v1609 = vsel %vm1553, %v1608, 0
    %v1612 = vsel %vm1556, %v1523, 0
    %1614 = vmatpush.msra.mxu0 0.0
    %1615 = vmatpush.msra.mxu0 0.0
    %1616 = vmatpush.msra.mxu0 0.0
    %1617 = vmatpush.msra.mxu0 0.0
    %1618 = vmatpush.msra.mxu0 0.0
    %1619 = vmatpush.msra.mxu0 0.0
    %1620 = vmatpush.msra.mxu0 0.0
    %1621 = vmatpush.msra.mxu0 0.0
    %1622 = vmatpush.msra.mxu0 0.0
    %1623 = vmatpush.msra.mxu0 0.0
    %1624 = vmatpush.msra.mxu0 0.0
    %1625 = vmatpush.msra.mxu0 0.0
    %1626 = vmatpush.msra.mxu0 0.0
    %1627 = vmatpush.msra.mxu0 0.0
    %1628 = vmatpush.msra.mxu0 0.0
    %1629 = vmatpush.msra.mxu0 %v1612
    %1630 = vmatmul.f32.gmra.mxu0 %v1609
    %v1631 = vpop.f32.mrf.mxu0
    %v1632 = vadd.f32 0.0, %v1631
    %1633 = vdwg.mxu0
    %v1636 = vrot.slane %v1578, 1
    %v1637 = vrot.slane %v1578, 2
    %v1638 = vrot.slane %v1578, 3
    %v1639 = vrot.slane %v1578, 4
    %v1640 = vrot.slane %v1632, 1
    %v1641 = vrot.slane %v1632, 2
    %v1642 = vrot.slane %v1632, 3
    %v1643 = vrot.slane %v1632, 4
    %v1644 = vld [vmem:[%s13] sm:$0xff]
    %v1645 = vld [vmem:[%s13 + $0x8] sm:$0xff]
    %v1646 = vld [vmem:[%s13 + $0x10] sm:$0xff]
    %v1647 = vld [vmem:[%s13 + $0x18] sm:$0xff]
    %v1648 = vld [vmem:[%s13 + $0x20] sm:$0xff]
    %v1649 = vld [vmem:[%s13 + $0x28] sm:$0xff]
    %v1650 = vld [vmem:[%s13 + $0x30] sm:$0xff]
    %v1651 = vld [vmem:[%s13 + $0x38] sm:$0xff]
    %v1652 = vld [vmem:[%s14] sm:$0xff]
    %v1653 = vld [vmem:[%s14 + $0x8] sm:$0xff]
    %v1654 = vld [vmem:[%s14 + $0x10] sm:$0xff]
    %v1655 = vld [vmem:[%s14 + $0x18] sm:$0xff]
    %1656 = vst [vmem:[#allocation1] ss:$9 sm:$0xff] %v818
    %s1657 = scalar_lea.vmem [#allocation1], 1
    %1658 = vst [vmem:[%s1657] ss:$9 sm:$0xff] %v822
    %s1659 = scalar_lea.vmem [#allocation1], 2
    %1660 = vst [vmem:[%s1659] ss:$9 sm:$0xff] %v823
    %s1661 = scalar_lea.vmem [#allocation1], 3
    %1662 = vst [vmem:[%s1661] ss:$9 sm:$0xff] %v824
    %s1663 = scalar_lea.vmem [#allocation1], 4
    %1664 = vst [vmem:[%s1663] ss:$9 sm:$0xff] %v825
    %s1665 = scalar_lea.vmem [#allocation1], 5
    %1666 = vst [vmem:[%s1665] ss:$9 sm:$0xff] %v819
    %s1667 = scalar_lea.vmem [#allocation1], 6
    %1668 = vst [vmem:[%s1667] ss:$9 sm:$0xff] %v826
    %s1669 = scalar_lea.vmem [#allocation1], 7
    %1670 = vst [vmem:[%s1669] ss:$9 sm:$0xff] %v827
    %v1671 = vld [vmem:[#allocation1] sm:$0xff]
    %1672 = vst [vmem:[#allocation1] ss:$9 sm:$0xff] %v828
    %1673 = vst [vmem:[%s1657] ss:$9 sm:$0xff] %v829
    %v1674 = vld [vmem:[#allocation1] sm:$0xff]
    %v1675 = vsel %vm185, %v1671, 0
    %v1677 = vsel %vm185, %v1674, 0
    %1679 = vmatpush.msra.mxu0 0.0
    %1680 = vmatpush.msra.mxu0 0.0
    %1681 = vmatpush.msra.mxu0 0.0
    %1682 = vmatpush.msra.mxu0 0.0
    %1683 = vmatpush.msra.mxu0 0.0
    %1684 = vmatpush.msra.mxu0 0.0
    %1685 = vmatpush.msra.mxu0 0.0
    %1686 = vmatpush.msra.mxu0 0.0
    %1687 = vmatpush.msra.mxu0 0.0
    %1688 = vmatpush.msra.mxu0 0.0
    %1689 = vmatpush.msra.mxu0 0.0
    %1690 = vmatpush.msra.mxu0 0.0
    %1691 = vmatpush.msra.mxu0 %v1655
    %1692 = vmatpush.msra.mxu0 %v1654
    %1693 = vmatpush.msra.mxu0 %v1653
    %1694 = vmatpush.msra.mxu0 %v1652
    %1695 = vmatmul.f32.gmra.mxu0 %v1675
    %v1696 = vpop.f32.mrf.mxu0
    %v1697 = vadd.f32 0.0, %v1696
    %1698 = vmatmul.f32.gmra.mxu0 %v1677
    %v1699 = vpop.f32.mrf.mxu0
    %v1700 = vadd.f32 0.0, %v1699
    %1701 = vdwg.mxu0
    %1702 = vst [vmem:[#allocation1] ss:$9 sm:$0xff] %v1578
    %s1703 = scalar_lea.vmem [#allocation1], 1
    %1704 = vst [vmem:[%s1703] ss:$9 sm:$0xff] %v1636
    %s1705 = scalar_lea.vmem [#allocation1], 2
    %1706 = vst [vmem:[%s1705] ss:$9 sm:$0xff] %v1637
    %s1707 = scalar_lea.vmem [#allocation1], 3
    %1708 = vst [vmem:[%s1707] ss:$9 sm:$0xff] %v1638
    %s1709 = scalar_lea.vmem [#allocation1], 4
    %1710 = vst [vmem:[%s1709] ss:$9 sm:$0xff] %v1639
    %s1711 = scalar_lea.vmem [#allocation1], 5
    %1712 = vst [vmem:[%s1711] ss:$9 sm:$0xff] %v1632
    %s1713 = scalar_lea.vmem [#allocation1], 6
    %1714 = vst [vmem:[%s1713] ss:$9 sm:$0xff] %v1640
    %s1715 = scalar_lea.vmem [#allocation1], 7
    %1716 = vst [vmem:[%s1715] ss:$9 sm:$0xff] %v1641
    %v1717 = vld [vmem:[#allocation1] sm:$0xff]
    %1718 = vst [vmem:[#allocation1] ss:$9 sm:$0xff] %v1642
    %1719 = vst [vmem:[%s1703] ss:$9 sm:$0xff] %v1643
    %v1720 = vld [vmem:[#allocation1] sm:$0xff]
    %v1721 = vsel %vm840, %v1717, 0
    %v1723 = vsel %vm840, %v1720, 0
    %1725 = vmatpush.msra.mxu0 0.0
    %1726 = vmatpush.msra.mxu0 0.0
    %1727 = vmatpush.msra.mxu0 0.0
    %1728 = vmatpush.msra.mxu0 0.0
    %1729 = vmatpush.msra.mxu0 0.0
    %1730 = vmatpush.msra.mxu0 0.0
    %1731 = vmatpush.msra.mxu0 0.0
    %1732 = vmatpush.msra.mxu0 0.0
    %1733 = vmatpush.msra.mxu0 %v1651
    %1734 = vmatpush.msra.mxu0 %v1650
    %1735 = vmatpush.msra.mxu0 %v1649
    %1736 = vmatpush.msra.mxu0 %v1648
    %1737 = vmatpush.msra.mxu0 %v1647
    %1738 = vmatpush.msra.mxu0 %v1646
    %1739 = vmatpush.msra.mxu0 %v1645
    %1740 = vmatpush.msra.mxu0 %v1644
    %1741 = vmatmul.f32.gmra.mxu0 %v1721
    %v1742 = vpop.f32.mrf.mxu0
    %v1743 = vadd.f32 %v1697, %v1742
    %1744 = vmatmul.f32.gmra.mxu0 %v1723
    %v1745 = vpop.f32.mrf.mxu0
    %v1746 = vadd.f32 %v1700, %v1745
    %1747 = vdwg.mxu0
    %v1748 = vld [vmem:[%s15] sm:$0x1]
    %v1750 = vperm.slane %v1748, 0
    %v1752 = vadd.f32 %v1743, %v1750
    %v1753 = vadd.f32 %v1746, %v1750
    %v1754 = vtanh.pop %v1752
    %v1755 = vtanh.pop %v1753
    %v1756 = vld [vmem:[%s16] sm:$0xff]
    %v1757 = vld [vmem:[%s16 + $0x8] sm:$0xff]
    %v1758 = vld [vmem:[%s16 + $0x10] sm:$0xff]
    %v1759 = vld [vmem:[%s16 + $0x18] sm:$0xff]
    %v1760 = vld [vmem:[%s17] sm:$0x1]
    %v1762 = vperm.slane %v1760, 0
    %v1765 = vsel %vm185, %v1754, 0
    %v1768 = vsel %vm185, %v1755, 0
    %1770 = vmatpush.msra.mxu0 0.0
    %1771 = vmatpush.msra.mxu0 0.0
    %1772 = vmatpush.msra.mxu0 0.0
    %1773 = vmatpush.msra.mxu0 0.0
    %1774 = vmatpush.msra.mxu0 0.0
    %1775 = vmatpush.msra.mxu0 0.0
    %1776 = vmatpush.msra.mxu0 0.0
    %1777 = vmatpush.msra.mxu0 0.0
    %1778 = vmatpush.msra.mxu0 0.0
    %1779 = vmatpush.msra.mxu0 0.0
    %1780 = vmatpush.msra.mxu0 0.0
    %1781 = vmatpush.msra.mxu0 0.0
    %1782 = vmatpush.msra.mxu0 %v1759
    %1783 = vmatpush.msra.mxu0 %v1758
    %1784 = vmatpush.msra.mxu0 %v1757
    %1785 = vmatpush.msra.mxu0 %v1756
    %1786 = vmatmul.f32.gmra.mxu0 %v1765
    %v1787 = vpop.f32.mrf.mxu0
    %v1788 = vadd.f32 %v1762, %v1787
    %1789 = vmatmul.f32.gmra.mxu0 %v1768
    %v1790 = vpop.f32.mrf.mxu0
    %v1791 = vadd.f32 %v1762, %v1790
    %1792 = vdwg.mxu0
    %1793 = vst.msk [vmem:[%s18] sm:$0xff] %vm840, %v1788
    %vm1794 = vcmask 517120
    %1795 = vst.msk [vmem:[%s18 + $0x8] sm:$0x3] %vm1794, %v1791
    // Predicated region
    $region74: #{decoder_forward.1} parent=1 // pred_check
      _
    $region75: #{decoder_forward.1} parent=1 // pred_check_branch
      %1797 = sbr.rel (0) target = $region77
    $region76: #{decoder_forward.1} parent=1 // pred_region
      _
    $region77: #{decoder_forward.1} parent=1 // pred_fallthru
      _
    // Predicated region
    $region78: #{decoder_forward.1} parent=1 // pred_check
      _
    $region79: #{decoder_forward.1} parent=1 // pred_check_branch
      %1799 = sbr.rel (0) target = $region81
    $region80: #{decoder_forward.1} parent=1 // pred_region
      %1801 = vsyncadd [#allocation4], 0
      %s1803 = sshll.u32 [#allocation3], 4
      %s1804 = int_to_ptr.vmem [resolvable:$true] %s1803
      %s1805 = sshll.u32 %s19, 4
      %s1806 = int_to_ptr.hbm [resolvable:$true] %s1805
      %1808 = dma.vmem_to_hbm [thread:$0]  %s1804, 32, %s1806, [#allocation4]
    $region81: #{decoder_forward.1} parent=1 // pred_fallthru
      _
    // Predicated region
    $region82: #{decoder_forward.1} parent=1 // pred_check
      _
    $region83: #{decoder_forward.1} parent=1 // pred_check_branch
      %1810 = sbr.rel (0) target = $region85
    $region84: #{decoder_forward.1} parent=1 // pred_region
      _
    $region85: #{decoder_forward.1} parent=1 // pred_fallthru
      _
    // Predicated region
    $region86: #{decoder_forward.1} parent=1 // pred_check
      _
    $region87: #{decoder_forward.1} parent=1 // pred_check_branch
      %1812 = sbr.rel (0) target = $region89
    $region88: #{decoder_forward.1} parent=1 // pred_region
      %1814 = dma.done [#allocation4], 32
    $region89: #{decoder_forward.1} parent=1 // pred_fallthru
      _
    %1815 = vsyncpa [#allocation4], 1

</llo_original>
